<compile_context>
chip_gen: v7x
topology: tpu7x:2x2x1
jax: 0.10.0
libtpu: 0.0.40
codegen_flags: <defaults>
</compile_context>

<pallas_src>
import math

import numpy as np
import jax
import jax.numpy as jnp
from jax.experimental import pallas as pl
from jax.experimental.pallas import tpu as pltpu

B, T, H = 2, 8, 64
NUM_HEADS = 8            # must equal T for the reference module's RoPE broadcast
HEAD_DIM = H // NUM_HEADS
MLP_DIM = 4 * H
LN_EPS = 1e-5
BT = B * T               # 16 rows processed in a single kernel invocation
assert NUM_HEADS == T


# ----------------------------------------------------------------------------- #
# small helpers used inside the kernel
# ----------------------------------------------------------------------------- #
def _dot(a, b):
    # [M, K] @ [K, N] -> [M, N], f32 accumulation on the MXU
    return jnp.dot(a, b, preferred_element_type=jnp.float32)


def _dot_nt(a, b):
    # a: [M, K], b: [N, K] -> [M, N]  (a @ b.T), f32 accumulation
    return jax.lax.dot_general(a, b, (((1,), (1,)), ((), ())),
                               preferred_element_type=jnp.float32)


def _layer_norm(x, gamma, beta):
    mu = jnp.mean(x, axis=-1, keepdims=True)
    var = jnp.mean((x - mu) ** 2, axis=-1, keepdims=True)
    return (x - mu) * jax.lax.rsqrt(var + LN_EPS) * gamma + beta


def _gelu_exact(x):
    # nn.GELU() default (approximate='none')
    return 0.5 * x * (1.0 + jax.lax.erf(x * (1.0 / math.sqrt(2.0))))


# ----------------------------------------------------------------------------- #
# Pallas kernel: the whole batch in one invocation (no grid)
# ----------------------------------------------------------------------------- #
def transformer_block_kernel(
    x_ref, amask_ref, cos2_ref, sin2_ref, hself_ref, hsel16_ref,
    wqkv_ref, bqkv_ref, wo_ref, bo_ref,
    g1_ref, be1_ref, g2_ref, be2_ref,
    w1_ref, b1_ref, w2_ref, b2_ref,
    o_ref,
):
    bf16 = jnp.bfloat16

    x = x_ref[...]                              # [BT, H] f32

    # ---------------- attention branch (pre-LN) ---------------- #
    h = _layer_norm(x, g1_ref[...], be1_ref[...])
    h16 = h.astype(bf16)

    # One fused projection matmul: columns ordered [ q | k | qr | kr | v ].
    # 1/sqrt(head_dim) and the rotate-half matrix R are pre-folded into the weights.
    qkv = _dot(h16, wqkv_ref[...]) + bqkv_ref[...]          # [BT, 5H] f32
    qk = qkv[:, : 2 * H]                                     # [BT, 2H] = [q | k]
    qkr = qkv[:, 2 * H: 4 * H]                               # [BT, 2H] = [qr | kr]
    v = qkv[:, 4 * H:]                                       # [BT, H]

    # RoPE: one lane-dense [BT, 128] elementwise combine (pure VPU work)
    qk = qk * cos2_ref[...] + qkr * sin2_ref[...]
    q = qk[:, :H]
    k = qk[:, H:]

    # All heads & all batch rows at once: tile K/V over heads along sublanes and
    # zero the channels that do not belong to each head (f32 masking, then bf16 cast).
    hself = hself_ref[...]                                   # [NH*BT, H] f32 0/1
    k_rep = jnp.concatenate([k] * NUM_HEADS, axis=0)         # [NH*BT, H]
    v_rep = jnp.concatenate([v] * NUM_HEADS, axis=0)
    k_exp16 = (k_rep * hself).astype(bf16)
    v_exp16 = (v_rep * hself).astype(bf16)

    # scores: s[i, h*BT + r] = <q_i, k_r> restricted to head h's channels  ([BT, NH*BT])
    # amask carries causal masking, the batch block-diagonal (-1e9 cross-batch) per head.
    s = _dot_nt(q.astype(bf16), k_exp16) + amask_ref[...]
    # shared per-row shift (softmax is shift-invariant within each head's segment)
    s = s - jnp.max(s, axis=-1, keepdims=True)
    e = jnp.exp(s)
    e16 = e.astype(bf16)

    num = _dot(e16, v_exp16)                  # [BT, H] sum_j p[h,i,j] * v[j, head-h ch]
    den = _dot(e16, hsel16_ref[...])          # [BT, H] per-head denominator
    den = jnp.maximum(den, 1e-30)             # guard approx reciprocal against underflow
    attn = num * pl.reciprocal(den, approx=True)

    attn = _dot(attn.astype(bf16), wo_ref[...]) + bo_ref[...]
    x1 = x + attn                             # dropout == identity (inference mode)

    # ---------------- MLP branch (pre-LN) ---------------- #
    h2 = _layer_norm(x1, g2_ref[...], be2_ref[...])
    m = _dot(h2.astype(bf16), w1_ref[...]) + b1_ref[...]
    m = _gelu_exact(m)
    m = _dot(m.astype(bf16), w2_ref[...]) + b2_ref[...]

    o_ref[...] = x1 + m
    # TODO(synk): for large B*T, present the output lane-dense ([*, >=128]) wrapper-side
    # to avoid masked vst; at [16, 64] the write path is negligible.


# ----------------------------------------------------------------------------- #
# Parameter / constant construction (runs ONCE, outside the hot path)
# ----------------------------------------------------------------------------- #
def make_params(key):
    ks = jax.random.split(key, 16)
    w = lambda k, shp, s=0.02: (s * jax.random.normal(k, shp)).astype(jnp.float32)
    return dict(
        wq=w(ks[0], (H, H)), bq=w(ks[1], (1, H)),
        wk=w(ks[2], (H, H)), bk=w(ks[3], (1, H)),
        wv=w(ks[4], (H, H)), bv=w(ks[5], (1, H)),
        wo=w(ks[6], (H, H)), bo=w(ks[7], (1, H)),
        g1=1.0 + w(ks[8], (1, H), 0.1), be1=w(ks[9], (1, H), 0.1),
        g2=1.0 + w(ks[10], (1, H), 0.1), be2=w(ks[11], (1, H), 0.1),
        w1=w(ks[12], (MLP_DIM, H)), b1=w(ks[13], (1, MLP_DIM)),
        w2=w(ks[14], (H, MLP_DIM)), b2=w(ks[15], (1, H)),
    )


def make_rot_matrix():
    # (x @ R)[2j] = -x[2j+1],  (x @ R)[2j+1] = x[2j]   (interleaved rotate-half)
    r = np.zeros((H, H), np.float32)
    for j in range(H // 2):
        r[2 * j + 1, 2 * j] = -1.0
        r[2 * j, 2 * j + 1] = 1.0
    return jnp.asarray(r)


def rope_tables():
    inv_freq = 1.0 / (10000.0 ** (jnp.arange(0, HEAD_DIM, 2, dtype=jnp.float32) / HEAD_DIM))
    pos = jnp.arange(T, dtype=jnp.float32)
    ang = pos[:, None] * inv_freq[None, :]                      # [T, hd/2]
    sin_buf, cos_buf = jnp.sin(ang), jnp.cos(ang)
    # interleave per pair, tile over heads -> [T, H]
    sin_f = jnp.tile(jnp.repeat(sin_buf, 2, axis=1), (1, NUM_HEADS))
    cos_f = jnp.tile(jnp.repeat(cos_buf, 2, axis=1), (1, NUM_HEADS))
    return cos_f, sin_f, sin_buf, cos_buf


def make_head_selector():
    # columns ordered c = h*(B*T) + (b*T + j); hsel[c, ch] = 1 iff ch belongs to head h
    m = np.zeros((NUM_HEADS * BT, H), np.float32)
    for hd in range(NUM_HEADS):
        m[hd * BT:(hd + 1) * BT, hd * HEAD_DIM:(hd + 1) * HEAD_DIM] = 1.0
    return jnp.asarray(m)


def make_attention_mask(mask):
    # base[i, r] = mask[t_i, j] if same batch else -1e9   ([B*T, B*T] block-diagonal)
    neg = jnp.full((T, T), -1e9, jnp.float32)
    rows = []
    for bi in range(B):
        rows.append(jnp.concatenate([mask if bj == bi else neg for bj in range(B)], axis=1))
    base = jnp.concatenate(rows, axis=0)
    # tile over heads along lanes -> [B*T, NH*B*T] = [16, 128]
    return jnp.tile(base, (1, NUM_HEADS))


def prepare_kernel_params(params):
    """Fold rotate-half (R) and 1/sqrt(head_dim) into the Q/K projections, fuse the five
    attention projections into one [H, 5H] bf16 weight (column order [q|k|qr|kr|v]),
    pre-transpose all matmul weights to [in, out] and cast them to bf16."""
    R = make_rot_matrix()
    scale = 1.0 / math.sqrt(HEAD_DIM)
    wq_s, bq_s = params["wq"] * scale, params["bq"] * scale
    wqr, bqr = R.T @ wq_s, bq_s @ R              # h @ (R^T W)^T == (h @ W^T) @ R
    wkr, bkr = R.T @ params["wk"], params["bk"] @ R

    w_fused = jnp.concatenate([wq_s, params["wk"], wqr, wkr, params["wv"]], axis=0)  # [5H, H]
    b_fused = jnp.concatenate([bq_s, params["bk"], bqr, bkr, params["bv"]], axis=1)  # [1, 5H]

    bf_t = lambda w: jnp.asarray(w).T.astype(jnp.bfloat16)   # [out,in] -> [in,out] bf16
    return dict(
        wqkv=bf_t(w_fused), bqkv=b_fused,
        wo=bf_t(params["wo"]), bo=params["bo"],
        g1=params["g1"], be1=params["be1"], g2=params["g2"], be2=params["be2"],
        w1=bf_t(params["w1"]), b1=params["b1"],
        w2=bf_t(params["w2"]), b2=params["b2"],
    )


def build_block_inputs(params, mask):
    """All per-model constants for the kernel (hoisted: computed once, reused every call)."""
    kp = prepare_kernel_params(params)
    cos_f, sin_f, _, _ = rope_tables()
    # RoPE tables tiled over batch (rows) and over the fused [q|k] halves (lanes): [BT, 2H]
    cos2 = jnp.tile(cos_f, (B, 2))
    sin2 = jnp.tile(sin_f, (B, 2))
    hsel = make_head_selector()
    amask = make_attention_mask(mask)
    return (amask, cos2, sin2, hsel, hsel.astype(jnp.bfloat16),
            kp["wqkv"], kp["bqkv"], kp["wo"], kp["bo"],
            kp["g1"], kp["be1"], kp["g2"], kp["be2"],
            kp["w1"], kp["b1"], kp["w2"], kp["b2"])


def transformer_block_pallas(x, prepared):
    """x: [B, T, H] f32 -> [B, T, H] f32. Single pallas_call, whole problem in VMEM."""
    x2 = x.reshape(BT, H)
    inputs = (x2,) + tuple(prepared)
    vmem = pl.BlockSpec(memory_space=pltpu.MemorySpace.VMEM)
    out = pl.pallas_call(
        transformer_block_kernel,
        out_shape=jax.ShapeDtypeStruct((BT, H), jnp.float32),
        in_specs=[vmem] * len(inputs),
        out_specs=vmem,
    )(*inputs)
    return out.reshape(B, T, H)


# ----------------------------------------------------------------------------- #
# Pure-JAX reference (line-by-line port of the PyTorch forward, eval mode)
# ----------------------------------------------------------------------------- #
def reference_forward(x, mask, params, sin_buf, cos_buf):
    def linear(v, w, b):
        return v @ w.T + b[0]

    def ln(v, g, b):
        mu = v.mean(-1, keepdims=True)
        var = ((v - mu) ** 2).mean(-1, keepdims=True)
        return (v - mu) / jnp.sqrt(var + LN_EPS) * g[0] + b[0]

    def rope(t4):  # t4: [B, nh, T, hd]
        seq_len = t4.shape[1]
        sin = sin_buf[:seq_len].reshape(1, seq_len, HEAD_DIM // 2, 1)
        cos = cos_buf[:seq_len].reshape(1, seq_len, HEAD_DIM // 2, 1)
        tr = t4.reshape(*t4.shape[:-1], HEAD_DIM // 2, 2)
        t1, t2 = tr[..., :1], tr[..., 1:]
        rot = jnp.concatenate([-t2, t1], axis=-1)
        return (tr * cos + rot * sin).reshape(t4.shape)

    h = ln(x, params["g1"], params["be1"])
    q = linear(h, params["wq"], params["bq"]).reshape(B, T, NUM_HEADS, HEAD_DIM).transpose(0, 2, 1, 3)
    k = linear(h, params["wk"], params["bk"]).reshape(B, T, NUM_HEADS, HEAD_DIM).transpose(0, 2, 1, 3)
    v = linear(h, params["wv"], params["bv"]).reshape(B, T, NUM_HEADS, HEAD_DIM).transpose(0, 2, 1, 3)
    q, k = rope(q), rope(k)
    attn = q @ jnp.swapaxes(k, -2, -1) / math.sqrt(HEAD_DIM)
    attn = attn + mask[None, None, :, :]
    attn = jax.nn.softmax(attn, axis=-1)
    out = (attn @ v).transpose(0, 2, 1, 3).reshape(B, T, H)
    out = linear(out, params["wo"], params["bo"])
    x1 = x + out
    h2 = ln(x1, params["g2"], params["be2"])
    m = linear(h2, params["w1"], params["b1"])
    m = 0.5 * m * (1.0 + jax.lax.erf(m / jnp.sqrt(2.0)))
    m = linear(m, params["w2"], params["b2"])
    return x1 + m


if __name__ == "__main__":
    key = jax.random.PRNGKey(0)
    kx, kparam = jax.random.split(key)
    x = jax.random.normal(kx, (B, T, H), dtype=jnp.float32)
    # causal attention mask [T, T]
    causal = jnp.tril(jnp.ones((T, T), dtype=bool))
    mask = jnp.where(causal, 0.0, -1e9).astype(jnp.float32)

    params = make_params(kparam)

    # Hoisted prep: all weight folding / fusion / casts and constant tables happen once.
    prepared = build_block_inputs(params, mask)
    prepared = tuple(jax.block_until_ready(a) for a in prepared)

    fwd = jax.jit(lambda xx: transformer_block_pallas(xx, prepared))
    y = jax.block_until_ready(fwd(x))

    _, _, sin_buf, cos_buf = rope_tables()
    y_ref = reference_forward(x, mask, params, sin_buf, cos_buf)
    max_err = float(jnp.max(jnp.abs(y - y_ref)))
    assert max_err < 2e-2, f"mismatch vs reference: {max_err}"

    print("KERNEL_OK")
</pallas_src>

<mosaic_0001>
module attributes {stable_mosaic.version = 11 : i64} {
  func.func @transformer_block_kernel(%arg0: memref<16x64xf32, #tpu.memory_space<vmem>>, %arg1: memref<16x128xf32, #tpu.memory_space<vmem>>, %arg2: memref<16x128xf32, #tpu.memory_space<vmem>>, %arg3: memref<16x128xf32, #tpu.memory_space<vmem>>, %arg4: memref<128x64xf32, #tpu.memory_space<vmem>>, %arg5: memref<128x64xbf16, #tpu.memory_space<vmem>>, %arg6: memref<64x320xbf16, #tpu.memory_space<vmem>>, %arg7: memref<1x320xf32, #tpu.memory_space<vmem>>, %arg8: memref<64x64xbf16, #tpu.memory_space<vmem>>, %arg9: memref<1x64xf32, #tpu.memory_space<vmem>>, %arg10: memref<1x64xf32, #tpu.memory_space<vmem>>, %arg11: memref<1x64xf32, #tpu.memory_space<vmem>>, %arg12: memref<1x64xf32, #tpu.memory_space<vmem>>, %arg13: memref<1x64xf32, #tpu.memory_space<vmem>>, %arg14: memref<64x256xbf16, #tpu.memory_space<vmem>>, %arg15: memref<1x256xf32, #tpu.memory_space<vmem>>, %arg16: memref<256x64xbf16, #tpu.memory_space<vmem>>, %arg17: memref<1x64xf32, #tpu.memory_space<vmem>>, %arg18: memref<16x64xf32, #tpu.memory_space<vmem>>) attributes {dimension_semantics = [], scalar_prefetch = 0 : i64, scratch_operands = 0 : i64, tpu.core_type = #tpu.core_type<tc>} {
    %c0 = arith.constant 0 : index
    %c0_0 = arith.constant 0 : index
    %0 = vector.load %arg0[%c0, %c0_0] : memref<16x64xf32, #tpu.memory_space<vmem>>, vector<16x64xf32>
    %c0_1 = arith.constant 0 : index
    %c0_2 = arith.constant 0 : index
    %1 = vector.load %arg10[%c0_1, %c0_2] : memref<1x64xf32, #tpu.memory_space<vmem>>, vector<1x64xf32>
    %c0_3 = arith.constant 0 : index
    %c0_4 = arith.constant 0 : index
    %2 = vector.load %arg11[%c0_3, %c0_4] : memref<1x64xf32, #tpu.memory_space<vmem>>, vector<1x64xf32>
    %cst = arith.constant dense<0.000000e+00> : vector<16xf32>
    %3 = vector.multi_reduction <add>, %0, %cst [1] : vector<16x64xf32> to vector<16xf32>
    %4 = vector.shape_cast %3 : vector<16xf32> to vector<16x1xf32>
    %cst_5 = arith.constant 6.400000e+01 : f32
    %5 = vector.broadcast %cst_5 : f32 to vector<16x1xf32>
    %6 = arith.divf %4, %5 : vector<16x1xf32>
    %7 = vector.broadcast %6 : vector<16x1xf32> to vector<16x64xf32>
    %8 = arith.subf %0, %7 : vector<16x64xf32>
    %9 = arith.mulf %8, %8 : vector<16x64xf32>
    %cst_6 = arith.constant dense<0.000000e+00> : vector<16xf32>
    %10 = vector.multi_reduction <add>, %9, %cst_6 [1] : vector<16x64xf32> to vector<16xf32>
    %11 = vector.shape_cast %10 : vector<16xf32> to vector<16x1xf32>
    %cst_7 = arith.constant 6.400000e+01 : f32
    %12 = vector.broadcast %cst_7 : f32 to vector<16x1xf32>
    %13 = arith.divf %11, %12 : vector<16x1xf32>
    %14 = vector.broadcast %6 : vector<16x1xf32> to vector<16x64xf32>
    %15 = arith.subf %0, %14 : vector<16x64xf32>
    %cst_8 = arith.constant 9.99999974E-6 : f32
    %16 = vector.broadcast %cst_8 : f32 to vector<16x1xf32>
    %17 = arith.addf %13, %16 : vector<16x1xf32>
    %18 = math.rsqrt %17 : vector<16x1xf32>
    %19 = vector.broadcast %18 : vector<16x1xf32> to vector<16x64xf32>
    %20 = arith.mulf %15, %19 : vector<16x64xf32>
    %21 = vector.broadcast %1 : vector<1x64xf32> to vector<16x64xf32>
    %22 = arith.mulf %20, %21 : vector<16x64xf32>
    %23 = vector.broadcast %2 : vector<1x64xf32> to vector<16x64xf32>
    %24 = arith.addf %22, %23 : vector<16x64xf32>
    %25 = arith.truncf %24 : vector<16x64xf32> to vector<16x64xbf16>
    %c0_9 = arith.constant 0 : index
    %c0_10 = arith.constant 0 : index
    %26 = vector.load %arg6[%c0_9, %c0_10] : memref<64x320xbf16, #tpu.memory_space<vmem>>, vector<64x320xbf16>
    %cst_11 = arith.constant dense<0.000000e+00> : vector<16x320xf32>
    %27 = tpu.matmul %25, %26, %cst_11 {dimension_numbers = #tpu.dot_dimension_numbers<[1], [0], [0], [1], [0, 0, 1, 1], [], []>} : vector<16x64xbf16>, vector<64x320xbf16>, vector<16x320xf32> -> vector<16x320xf32>
    %c0_12 = arith.constant 0 : index
    %c0_13 = arith.constant 0 : index
    %28 = vector.load %arg7[%c0_12, %c0_13] : memref<1x320xf32, #tpu.memory_space<vmem>>, vector<1x320xf32>
    %29 = vector.broadcast %28 : vector<1x320xf32> to vector<16x320xf32>
    %30 = arith.addf %27, %29 : vector<16x320xf32>
    %31 = vector.extract_strided_slice %30 {offsets = [0, 0], sizes = [16, 128], strides = [1, 1]} : vector<16x320xf32> to vector<16x128xf32>
    %32 = vector.extract_strided_slice %30 {offsets = [0, 128], sizes = [16, 128], strides = [1, 1]} : vector<16x320xf32> to vector<16x128xf32>
    %33 = vector.extract_strided_slice %30 {offsets = [0, 256], sizes = [16, 64], strides = [1, 1]} : vector<16x320xf32> to vector<16x64xf32>
    %c0_14 = arith.constant 0 : index
    %c0_15 = arith.constant 0 : index
    %34 = vector.load %arg2[%c0_14, %c0_15] : memref<16x128xf32, #tpu.memory_space<vmem>>, vector<16x128xf32>
    %35 = arith.mulf %31, %34 : vector<16x128xf32>
    %c0_16 = arith.constant 0 : index
    %c0_17 = arith.constant 0 : index
    %36 = vector.load %arg3[%c0_16, %c0_17] : memref<16x128xf32, #tpu.memory_space<vmem>>, vector<16x128xf32>
    %37 = arith.mulf %32, %36 : vector<16x128xf32>
    %38 = arith.addf %35, %37 : vector<16x128xf32>
    %39 = vector.extract_strided_slice %38 {offsets = [0, 0], sizes = [16, 64], strides = [1, 1]} : vector<16x128xf32> to vector<16x64xf32>
    %40 = vector.extract_strided_slice %38 {offsets = [0, 64], sizes = [16, 64], strides = [1, 1]} : vector<16x128xf32> to vector<16x64xf32>
    %c0_18 = arith.constant 0 : index
    %c0_19 = arith.constant 0 : index
    %41 = vector.load %arg4[%c0_18, %c0_19] : memref<128x64xf32, #tpu.memory_space<vmem>>, vector<128x64xf32>
    %42 = tpu.concatenate %40, %40, %40, %40, %40, %40, %40, %40 in 0 : vector<16x64xf32>, vector<16x64xf32>, vector<16x64xf32>, vector<16x64xf32>, vector<16x64xf32>, vector<16x64xf32>, vector<16x64xf32>, vector<16x64xf32> -> vector<128x64xf32>
    %43 = tpu.concatenate %33, %33, %33, %33, %33, %33, %33, %33 in 0 : vector<16x64xf32>, vector<16x64xf32>, vector<16x64xf32>, vector<16x64xf32>, vector<16x64xf32>, vector<16x64xf32>, vector<16x64xf32>, vector<16x64xf32> -> vector<128x64xf32>
    %44 = arith.mulf %42, %41 : vector<128x64xf32>
    %45 = arith.truncf %44 : vector<128x64xf32> to vector<128x64xbf16>
    %46 = arith.mulf %43, %41 : vector<128x64xf32>
    %47 = arith.truncf %46 : vector<128x64xf32> to vector<128x64xbf16>
    %48 = arith.truncf %39 : vector<16x64xf32> to vector<16x64xbf16>
    %cst_20 = arith.constant dense<0.000000e+00> : vector<16x128xf32>
    %49 = tpu.matmul %48, %45, %cst_20 {dimension_numbers = #tpu.dot_dimension_numbers<[1], [1], [0], [0], [0, 0, 1, 0], [], []>} : vector<16x64xbf16>, vector<128x64xbf16>, vector<16x128xf32> -> vector<16x128xf32>
    %c0_21 = arith.constant 0 : index
    %c0_22 = arith.constant 0 : index
    %50 = vector.load %arg1[%c0_21, %c0_22] : memref<16x128xf32, #tpu.memory_space<vmem>>, vector<16x128xf32>
    %51 = arith.addf %49, %50 : vector<16x128xf32>
    %cst_23 = arith.constant dense<0xFF800000> : vector<16xf32>
    %52 = vector.multi_reduction <maximumf>, %51, %cst_23 [1] : vector<16x128xf32> to vector<16xf32>
    %53 = vector.shape_cast %52 : vector<16xf32> to vector<16x1xf32>
    %54 = vector.broadcast %53 : vector<16x1xf32> to vector<16x128xf32>
    %55 = arith.subf %51, %54 : vector<16x128xf32>
    %56 = math.exp %55 : vector<16x128xf32>
    %57 = arith.truncf %56 : vector<16x128xf32> to vector<16x128xbf16>
    %cst_24 = arith.constant dense<0.000000e+00> : vector<16x64xf32>
    %58 = tpu.matmul %57, %47, %cst_24 {dimension_numbers = #tpu.dot_dimension_numbers<[1], [0], [0], [1], [0, 0, 1, 1], [], []>} : vector<16x128xbf16>, vector<128x64xbf16>, vector<16x64xf32> -> vector<16x64xf32>
    %c0_25 = arith.constant 0 : index
    %c0_26 = arith.constant 0 : index
    %59 = vector.load %arg5[%c0_25, %c0_26] : memref<128x64xbf16, #tpu.memory_space<vmem>>, vector<128x64xbf16>
    %cst_27 = arith.constant dense<0.000000e+00> : vector<16x64xf32>
    %60 = tpu.matmul %57, %59, %cst_27 {dimension_numbers = #tpu.dot_dimension_numbers<[1], [0], [0], [1], [0, 0, 1, 1], [], []>} : vector<16x128xbf16>, vector<128x64xbf16>, vector<16x64xf32> -> vector<16x64xf32>
    %cst_28 = arith.constant 1.000000e-30 : f32
    %61 = vector.broadcast %cst_28 : f32 to vector<16x64xf32>
    %62 = arith.maximumf %60, %61 : vector<16x64xf32>
    %63 = tpu.reciprocal %62 {approx = true} : vector<16x64xf32> -> vector<16x64xf32>
    %64 = arith.mulf %58, %63 : vector<16x64xf32>
    %65 = arith.truncf %64 : vector<16x64xf32> to vector<16x64xbf16>
    %c0_29 = arith.constant 0 : index
    %c0_30 = arith.constant 0 : index
    %66 = vector.load %arg8[%c0_29, %c0_30] : memref<64x64xbf16, #tpu.memory_space<vmem>>, vector<64x64xbf16>
    %cst_31 = arith.constant dense<0.000000e+00> : vector<16x64xf32>
    %67 = tpu.matmul %65, %66, %cst_31 {dimension_numbers = #tpu.dot_dimension_numbers<[1], [0], [0], [1], [0, 0, 1, 1], [], []>} : vector<16x64xbf16>, vector<64x64xbf16>, vector<16x64xf32> -> vector<16x64xf32>
    %c0_32 = arith.constant 0 : index
    %c0_33 = arith.constant 0 : index
    %68 = vector.load %arg9[%c0_32, %c0_33] : memref<1x64xf32, #tpu.memory_space<vmem>>, vector<1x64xf32>
    %69 = vector.broadcast %68 : vector<1x64xf32> to vector<16x64xf32>
    %70 = arith.addf %67, %69 : vector<16x64xf32>
    %71 = arith.addf %0, %70 : vector<16x64xf32>
    %c0_34 = arith.constant 0 : index
    %c0_35 = arith.constant 0 : index
    %72 = vector.load %arg12[%c0_34, %c0_35] : memref<1x64xf32, #tpu.memory_space<vmem>>, vector<1x64xf32>
    %c0_36 = arith.constant 0 : index
    %c0_37 = arith.constant 0 : index
    %73 = vector.load %arg13[%c0_36, %c0_37] : memref<1x64xf32, #tpu.memory_space<vmem>>, vector<1x64xf32>
    %cst_38 = arith.constant dense<0.000000e+00> : vector<16xf32>
    %74 = vector.multi_reduction <add>, %71, %cst_38 [1] : vector<16x64xf32> to vector<16xf32>
    %75 = vector.shape_cast %74 : vector<16xf32> to vector<16x1xf32>
    %cst_39 = arith.constant 6.400000e+01 : f32
    %76 = vector.broadcast %cst_39 : f32 to vector<16x1xf32>
    %77 = arith.divf %75, %76 : vector<16x1xf32>
    %78 = vector.broadcast %77 : vector<16x1xf32> to vector<16x64xf32>
    %79 = arith.subf %71, %78 : vector<16x64xf32>
    %80 = arith.mulf %79, %79 : vector<16x64xf32>
    %cst_40 = arith.constant dense<0.000000e+00> : vector<16xf32>
    %81 = vector.multi_reduction <add>, %80, %cst_40 [1] : vector<16x64xf32> to vector<16xf32>
    %82 = vector.shape_cast %81 : vector<16xf32> to vector<16x1xf32>
    %cst_41 = arith.constant 6.400000e+01 : f32
    %83 = vector.broadcast %cst_41 : f32 to vector<16x1xf32>
    %84 = arith.divf %82, %83 : vector<16x1xf32>
    %85 = vector.broadcast %77 : vector<16x1xf32> to vector<16x64xf32>
    %86 = arith.subf %71, %85 : vector<16x64xf32>
    %cst_42 = arith.constant 9.99999974E-6 : f32
    %87 = vector.broadcast %cst_42 : f32 to vector<16x1xf32>
    %88 = arith.addf %84, %87 : vector<16x1xf32>
    %89 = math.rsqrt %88 : vector<16x1xf32>
    %90 = vector.broadcast %89 : vector<16x1xf32> to vector<16x64xf32>
    %91 = arith.mulf %86, %90 : vector<16x64xf32>
    %92 = vector.broadcast %72 : vector<1x64xf32> to vector<16x64xf32>
    %93 = arith.mulf %91, %92 : vector<16x64xf32>
    %94 = vector.broadcast %73 : vector<1x64xf32> to vector<16x64xf32>
    %95 = arith.addf %93, %94 : vector<16x64xf32>
    %96 = arith.truncf %95 : vector<16x64xf32> to vector<16x64xbf16>
    %c0_43 = arith.constant 0 : index
    %c0_44 = arith.constant 0 : index
    %97 = vector.load %arg14[%c0_43, %c0_44] : memref<64x256xbf16, #tpu.memory_space<vmem>>, vector<64x256xbf16>
    %cst_45 = arith.constant dense<0.000000e+00> : vector<16x256xf32>
    %98 = tpu.matmul %96, %97, %cst_45 {dimension_numbers = #tpu.dot_dimension_numbers<[1], [0], [0], [1], [0, 0, 1, 1], [], []>} : vector<16x64xbf16>, vector<64x256xbf16>, vector<16x256xf32> -> vector<16x256xf32>
    %c0_46 = arith.constant 0 : index
    %c0_47 = arith.constant 0 : index
    %99 = vector.load %arg15[%c0_46, %c0_47] : memref<1x256xf32, #tpu.memory_space<vmem>>, vector<1x256xf32>
    %100 = vector.broadcast %99 : vector<1x256xf32> to vector<16x256xf32>
    %101 = arith.addf %98, %100 : vector<16x256xf32>
    %cst_48 = arith.constant 5.000000e-01 : f32
    %102 = vector.broadcast %cst_48 : f32 to vector<16x256xf32>
    %103 = arith.mulf %102, %101 : vector<16x256xf32>
    %cst_49 = arith.constant 0.707106769 : f32
    %104 = vector.broadcast %cst_49 : f32 to vector<16x256xf32>
    %105 = arith.mulf %101, %104 : vector<16x256xf32>
    %106 = math.erf %105 : vector<16x256xf32>
    %cst_50 = arith.constant 1.000000e+00 : f32
    %107 = vector.broadcast %cst_50 : f32 to vector<16x256xf32>
    %108 = arith.addf %107, %106 : vector<16x256xf32>
    %109 = arith.mulf %103, %108 : vector<16x256xf32>
    %110 = arith.truncf %109 : vector<16x256xf32> to vector<16x256xbf16>
    %c0_51 = arith.constant 0 : index
    %c0_52 = arith.constant 0 : index
    %111 = vector.load %arg16[%c0_51, %c0_52] : memref<256x64xbf16, #tpu.memory_space<vmem>>, vector<256x64xbf16>
    %cst_53 = arith.constant dense<0.000000e+00> : vector<16x64xf32>
    %112 = tpu.matmul %110, %111, %cst_53 {dimension_numbers = #tpu.dot_dimension_numbers<[1], [0], [0], [1], [0, 0, 1, 1], [], []>} : vector<16x256xbf16>, vector<256x64xbf16>, vector<16x64xf32> -> vector<16x64xf32>
    %c0_54 = arith.constant 0 : index
    %c0_55 = arith.constant 0 : index
    %113 = vector.load %arg17[%c0_54, %c0_55] : memref<1x64xf32, #tpu.memory_space<vmem>>, vector<1x64xf32>
    %114 = vector.broadcast %113 : vector<1x64xf32> to vector<16x64xf32>
    %115 = arith.addf %112, %114 : vector<16x64xf32>
    %116 = arith.addf %71, %115 : vector<16x64xf32>
    %c0_56 = arith.constant 0 : index
    %c0_57 = arith.constant 0 : index
    %117 = vector.load %arg18[%c0_56, %c0_57] : memref<16x64xf32, #tpu.memory_space<vmem>>, vector<16x64xf32>
    tpu.vector_store %arg18[%c0_56, %c0_57], %116 {strides = array<i32>} : memref<16x64xf32, #tpu.memory_space<vmem>>, vector<16x64xf32>,
    return
  }
}

</mosaic_0001>

<llo_original>
// kernel: _lambda_.1
$region0: #{_lambda_.1}
  #allocation0 [shape = 'u32[]', space=smem, size = 0x4, offset = 0x4, fixed_abs, tag = 'smem constant byte address 0x4 - core index']
  #allocation1 [shape = 'u32[144,128]{1,0:T(1,128)}', space=vmem, size = 0x12000, scoped, tag = 'internal scratch']
  %s0 = inlined_call_operand.hbm [shape: f32[16,64], index: 0, kind: input, shape index: {}]
  %s1 = inlined_call_operand.hbm [shape: f32[16,128], index: 1, kind: input, shape index: {}]
  %s2 = inlined_call_operand.hbm [shape: f32[16,128], index: 2, kind: input, shape index: {}]
  %s3 = inlined_call_operand.hbm [shape: f32[16,128], index: 3, kind: input, shape index: {}]
  %s4 = inlined_call_operand.vmem [shape: f32[128,64], index: 4, kind: input, shape index: {}]
  %s5 = inlined_call_operand.hbm [shape: bf16[128,64], index: 5, kind: input, shape index: {}]
  %s6 = inlined_call_operand.vmem [shape: bf16[64,320], index: 6, kind: input, shape index: {}]
  %s7 = inlined_call_operand.hbm [shape: f32[1,320], index: 7, kind: input, shape index: {}]
  %s8 = inlined_call_operand.vmem [shape: bf16[64,64], index: 8, kind: input, shape index: {}]
  %s9 = inlined_call_operand.hbm [shape: f32[1,64], index: 9, kind: input, shape index: {}]
  %s10 = inlined_call_operand.hbm [shape: f32[1,64], index: 10, kind: input, shape index: {}]
  %s11 = inlined_call_operand.hbm [shape: f32[1,64], index: 11, kind: input, shape index: {}]
  %s12 = inlined_call_operand.hbm [shape: f32[1,64], index: 12, kind: input, shape index: {}]
  %s13 = inlined_call_operand.hbm [shape: f32[1,64], index: 13, kind: input, shape index: {}]
  %s14 = inlined_call_operand.vmem [shape: bf16[64,256], index: 14, kind: input, shape index: {}]
  %s15 = inlined_call_operand.hbm [shape: f32[1,256], index: 15, kind: input, shape index: {}]
  %s16 = inlined_call_operand.vmem [shape: bf16[256,64], index: 16, kind: input, shape index: {}]
  %s17 = inlined_call_operand.hbm [shape: f32[1,64], index: 17, kind: input, shape index: {}]
  %s18 = inlined_call_operand.hbm [shape: f32[16,64], index: 18, kind: output, shape index: {}]
  %s19 = sld [smem:[#allocation0]]
  $region134: #{_lambda_.1} parent=0
    _
  %s21 = ssub.s32 1, %s19
  %s22 = scalar_select 0, %s21, %s19
  $region1: #{_lambda_.1} parent=0
    #allocation2 [shape = 'u8[8192]{0}', space=vmem, size = 0x2000, scoped, tag = 'input window, operand 0, single buffered']
    #allocation3 [shape = 's32[1]{0}', space=sflag, size = 0x4, scoped, tag = 'scoped memory for _lambda_.1']
    #allocation4 [shape = 's32[1]{0}', space=sflag, size = 0x4, scoped, tag = 'scoped memory for _lambda_.1']
    #allocation5 [shape = 'u8[8192]{0}', space=vmem, size = 0x2000, scoped, tag = 'input window, operand 1, single buffered']
    #allocation6 [shape = 's32[1]{0}', space=sflag, size = 0x4, scoped, tag = 'scoped memory for _lambda_.1']
    #allocation7 [shape = 'u8[8192]{0}', space=vmem, size = 0x2000, scoped, tag = 'input window, operand 2, single buffered']
    #allocation8 [shape = 'u8[8192]{0}', space=vmem, size = 0x2000, scoped, tag = 'input window, operand 3, single buffered']
    #allocation9 [shape = 's32[1]{0}', space=sflag, size = 0x4, scoped, tag = 'scoped memory for _lambda_.1']
    #allocation10 [shape = 'u8[32768]{0}', space=vmem, size = 0x8000, scoped, tag = 'input window, operand 5, single buffered']
    #allocation11 [shape = 'u8[1536]{0}', space=vmem, size = 0x800, scoped, tag = 'input window, operand 7, single buffered']
    #allocation12 [shape = 's32[1]{0}', space=sflag, size = 0x4, scoped, tag = 'scoped memory for _lambda_.1']
    #allocation13 [shape = 'u8[512]{0}', space=vmem, size = 0x400, scoped, tag = 'input window, operand 9, single buffered']
    #allocation14 [shape = 'u8[512]{0}', space=vmem, size = 0x400, scoped, tag = 'input window, operand 10, single buffered']
    #allocation15 [shape = 's32[1]{0}', space=sflag, size = 0x4, scoped, tag = 'scoped memory for _lambda_.1']
    #allocation16 [shape = 'u8[512]{0}', space=vmem, size = 0x400, scoped, tag = 'input window, operand 11, single buffered']
    #allocation17 [shape = 'u8[512]{0}', space=vmem, size = 0x400, scoped, tag = 'input window, operand 12, single buffered']
    #allocation18 [shape = 's32[1]{0}', space=sflag, size = 0x4, scoped, tag = 'scoped memory for _lambda_.1']
    #allocation19 [shape = 'u8[512]{0}', space=vmem, size = 0x400, scoped, tag = 'input window, operand 13, single buffered']
    #allocation20 [shape = 'u8[1024]{0}', space=vmem, size = 0x400, scoped, tag = 'input window, operand 15, single buffered']
    #allocation21 [shape = 's32[1]{0}', space=sflag, size = 0x4, scoped, tag = 'scoped memory for _lambda_.1']
    #allocation22 [shape = 'u8[512]{0}', space=vmem, size = 0x400, scoped, tag = 'input window, operand 17, single buffered']
    #allocation23 [shape = 'u8[8192]{0}', space=vmem, size = 0x2000, scoped, tag = 'output window, operand 0, single buffered']
    %23 = vsyncpa [#allocation3], 0
    %24 = vsyncpa [#allocation6], 0
    %25 = vsyncpa [#allocation9], 0
    %26 = vsyncpa [#allocation12], 0
    %27 = vsyncpa [#allocation15], 0
    %28 = vsyncpa [#allocation18], 0
    %29 = vsyncpa [#allocation21], 0
    %30 = vsyncpa [#allocation4], 0
    // Predicated region
    $region2: #{_lambda_.1} parent=1 // pred_check
      _
    $region3: #{_lambda_.1} parent=1 // pred_check_branch
      %32 = sbr.rel (0) target = $region5
    $region4: #{_lambda_.1} parent=1 // pred_region
      %s34 = ssub.s32 256, 256
      %35 = vsyncadd [#allocation3], %s34
      %s36 = sshll.u32 [#allocation2], 4
      %s37 = int_to_ptr.vmem [resolvable:$true] %s36
      %42 = dma.hbm_to_vmem [thread:$0]  %s0, 256, %s37, [#allocation3], 128, 128, 8
    $region5: #{_lambda_.1} parent=1 // pred_fallthru
      _
    // Predicated region
    $region6: #{_lambda_.1} parent=1 // pred_check
      _
    $region7: #{_lambda_.1} parent=1 // pred_check_branch
      %44 = sbr.rel (0) target = $region9
    $region8: #{_lambda_.1} parent=1 // pred_region
      %s46 = ssub.s32 256, 256
      %47 = vsyncadd [#allocation6], %s46
      %s48 = sshll.u32 [#allocation5], 4
      %s49 = int_to_ptr.vmem [resolvable:$true] %s48
      %54 = dma.hbm_to_vmem [thread:$0]  %s1, 256, %s49, [#allocation6], 128, 128, 8
    $region9: #{_lambda_.1} parent=1 // pred_fallthru
      _
    // Predicated region
    $region10: #{_lambda_.1} parent=1 // pred_check
      _
    $region11: #{_lambda_.1} parent=1 // pred_check_branch
      %56 = sbr.rel (0) target = $region13
    $region12: #{_lambda_.1} parent=1 // pred_region
      %s58 = ssub.s32 256, 256
      %59 = vsyncadd [#allocation6], %s58
      %s60 = sshll.u32 [#allocation7], 4
      %s61 = int_to_ptr.vmem [resolvable:$true] %s60
      %66 = dma.hbm_to_vmem [thread:$0]  %s2, 256, %s61, [#allocation6], 128, 128, 8
    $region13: #{_lambda_.1} parent=1 // pred_fallthru
      _
    // Predicated region
    $region14: #{_lambda_.1} parent=1 // pred_check
      _
    $region15: #{_lambda_.1} parent=1 // pred_check_branch
      %68 = sbr.rel (0) target = $region17
    $region16: #{_lambda_.1} parent=1 // pred_region
      %s70 = ssub.s32 256, 256
      %71 = vsyncadd [#allocation9], %s70
      %s72 = sshll.u32 [#allocation8], 4
      %s73 = int_to_ptr.vmem [resolvable:$true] %s72
      %78 = dma.hbm_to_vmem [thread:$0]  %s3, 256, %s73, [#allocation9], 128, 128, 8
    $region17: #{_lambda_.1} parent=1 // pred_fallthru
      _
    // Predicated region
    $region18: #{_lambda_.1} parent=1 // pred_check
      _
    $region19: #{_lambda_.1} parent=1 // pred_check_branch
      %80 = sbr.rel (0) target = $region21
    $region20: #{_lambda_.1} parent=1 // pred_region
      _
    $region21: #{_lambda_.1} parent=1 // pred_fallthru
      _
    // Predicated region
    $region22: #{_lambda_.1} parent=1 // pred_check
      _
    $region23: #{_lambda_.1} parent=1 // pred_check_branch
      %82 = sbr.rel (0) target = $region25
    $region24: #{_lambda_.1} parent=1 // pred_region
      %s84 = ssub.s32 1024, 1024
      %85 = vsyncadd [#allocation9], %s84
      %s86 = sshll.u32 [#allocation10], 4
      %s87 = int_to_ptr.vmem [resolvable:$true] %s86
      %92 = dma.hbm_to_vmem [thread:$0]  %s5, 1024, %s87, [#allocation9], 64, 64, 4
    $region25: #{_lambda_.1} parent=1 // pred_fallthru
      _
    // Predicated region
    $region26: #{_lambda_.1} parent=1 // pred_check
      _
    $region27: #{_lambda_.1} parent=1 // pred_check_branch
      %94 = sbr.rel (0) target = $region29
    $region28: #{_lambda_.1} parent=1 // pred_region
      _
    $region29: #{_lambda_.1} parent=1 // pred_fallthru
      _
    // Predicated region
    $region30: #{_lambda_.1} parent=1 // pred_check
      _
    $region31: #{_lambda_.1} parent=1 // pred_check_branch
      %96 = sbr.rel (0) target = $region33
    $region32: #{_lambda_.1} parent=1 // pred_region
      %s98 = ssub.s32 48, 48
      %99 = vsyncadd [#allocation12], %s98
      %s101 = sshll.u32 [#allocation11], 4
      %s102 = int_to_ptr.vmem [resolvable:$true] %s101
      %104 = dma.hbm_to_vmem [thread:$0]  %s7, 48, %s102, [#allocation12]
    $region33: #{_lambda_.1} parent=1 // pred_fallthru
      _
    // Predicated region
    $region34: #{_lambda_.1} parent=1 // pred_check
      _
    $region35: #{_lambda_.1} parent=1 // pred_check_branch
      %106 = sbr.rel (0) target = $region37
    $region36: #{_lambda_.1} parent=1 // pred_region
      _
    $region37: #{_lambda_.1} parent=1 // pred_fallthru
      _
    // Predicated region
    $region38: #{_lambda_.1} parent=1 // pred_check
      _
    $region39: #{_lambda_.1} parent=1 // pred_check_branch
      %108 = sbr.rel (0) target = $region41
    $region40: #{_lambda_.1} parent=1 // pred_region
      %s110 = ssub.s32 16, 16
      %111 = vsyncadd [#allocation12], %s110
      %s113 = sshll.u32 [#allocation13], 4
      %s114 = int_to_ptr.vmem [resolvable:$true] %s113
      %116 = dma.hbm_to_vmem [thread:$0]  %s9, 16, %s114, [#allocation12]
    $region41: #{_lambda_.1} parent=1 // pred_fallthru
      _
    // Predicated region
    $region42: #{_lambda_.1} parent=1 // pred_check
      _
    $region43: #{_lambda_.1} parent=1 // pred_check_branch
      %118 = sbr.rel (0) target = $region45
    $region44: #{_lambda_.1} parent=1 // pred_region
      %s120 = ssub.s32 16, 16
      %121 = vsyncadd [#allocation15], %s120
      %s123 = sshll.u32 [#allocation14], 4
      %s124 = int_to_ptr.vmem [resolvable:$true] %s123
      %126 = dma.hbm_to_vmem [thread:$0]  %s10, 16, %s124, [#allocation15]
    $region45: #{_lambda_.1} parent=1 // pred_fallthru
      _
    // Predicated region
    $region46: #{_lambda_.1} parent=1 // pred_check
      _
    $region47: #{_lambda_.1} parent=1 // pred_check_branch
      %128 = sbr.rel (0) target = $region49
    $region48: #{_lambda_.1} parent=1 // pred_region
      %s130 = ssub.s32 16, 16
      %131 = vsyncadd [#allocation15], %s130
      %s133 = sshll.u32 [#allocation16], 4
      %s134 = int_to_ptr.vmem [resolvable:$true] %s133
      %136 = dma.hbm_to_vmem [thread:$0]  %s11, 16, %s134, [#allocation15]
    $region49: #{_lambda_.1} parent=1 // pred_fallthru
      _
    // Predicated region
    $region50: #{_lambda_.1} parent=1 // pred_check
      _
    $region51: #{_lambda_.1} parent=1 // pred_check_branch
      %138 = sbr.rel (0) target = $region53
    $region52: #{_lambda_.1} parent=1 // pred_region
      %s140 = ssub.s32 16, 16
      %141 = vsyncadd [#allocation18], %s140
      %s143 = sshll.u32 [#allocation17], 4
      %s144 = int_to_ptr.vmem [resolvable:$true] %s143
      %146 = dma.hbm_to_vmem [thread:$0]  %s12, 16, %s144, [#allocation18]
    $region53: #{_lambda_.1} parent=1 // pred_fallthru
      _
    // Predicated region
    $region54: #{_lambda_.1} parent=1 // pred_check
      _
    $region55: #{_lambda_.1} parent=1 // pred_check_branch
      %148 = sbr.rel (0) target = $region57
    $region56: #{_lambda_.1} parent=1 // pred_region
      %s150 = ssub.s32 16, 16
      %151 = vsyncadd [#allocation18], %s150
      %s153 = sshll.u32 [#allocation19], 4
      %s154 = int_to_ptr.vmem [resolvable:$true] %s153
      %156 = dma.hbm_to_vmem [thread:$0]  %s13, 16, %s154, [#allocation18]
    $region57: #{_lambda_.1} parent=1 // pred_fallthru
      _
    // Predicated region
    $region58: #{_lambda_.1} parent=1 // pred_check
      _
    $region59: #{_lambda_.1} parent=1 // pred_check_branch
      %158 = sbr.rel (0) target = $region61
    $region60: #{_lambda_.1} parent=1 // pred_region
      _
    $region61: #{_lambda_.1} parent=1 // pred_fallthru
      _
    // Predicated region
    $region62: #{_lambda_.1} parent=1 // pred_check
      _
    $region63: #{_lambda_.1} parent=1 // pred_check_branch
      %160 = sbr.rel (0) target = $region65
    $region64: #{_lambda_.1} parent=1 // pred_region
      %s162 = ssub.s32 32, 32
      %163 = vsyncadd [#allocation21], %s162
      %s165 = sshll.u32 [#allocation20], 4
      %s166 = int_to_ptr.vmem [resolvable:$true] %s165
      %168 = dma.hbm_to_vmem [thread:$0]  %s15, 32, %s166, [#allocation21]
    $region65: #{_lambda_.1} parent=1 // pred_fallthru
      _
    // Predicated region
    $region66: #{_lambda_.1} parent=1 // pred_check
      _
    $region67: #{_lambda_.1} parent=1 // pred_check_branch
      %170 = sbr.rel (0) target = $region69
    $region68: #{_lambda_.1} parent=1 // pred_region
      _
    $region69: #{_lambda_.1} parent=1 // pred_fallthru
      _
    // Predicated region
    $region70: #{_lambda_.1} parent=1 // pred_check
      _
    $region71: #{_lambda_.1} parent=1 // pred_check_branch
      %172 = sbr.rel (0) target = $region73
    $region72: #{_lambda_.1} parent=1 // pred_region
      %s174 = ssub.s32 16, 16
      %175 = vsyncadd [#allocation21], %s174
      %s177 = sshll.u32 [#allocation22], 4
      %s178 = int_to_ptr.vmem [resolvable:$true] %s177
      %180 = dma.hbm_to_vmem [thread:$0]  %s17, 16, %s178, [#allocation21]
    $region73: #{_lambda_.1} parent=1 // pred_fallthru
      _
    // Predicated region
    $region74: #{_lambda_.1} parent=1 // pred_check
      _
    $region75: #{_lambda_.1} parent=1 // pred_check_branch
      %182 = sbr.rel (0) target = $region77
    $region76: #{_lambda_.1} parent=1 // pred_region
      %183 = dma.done [#allocation3], 256
    $region77: #{_lambda_.1} parent=1 // pred_fallthru
      _
    // Predicated region
    $region78: #{_lambda_.1} parent=1 // pred_check
      _
    $region79: #{_lambda_.1} parent=1 // pred_check_branch
      %185 = sbr.rel (0) target = $region81
    $region80: #{_lambda_.1} parent=1 // pred_region
      %186 = dma.done [#allocation6], 256
    $region81: #{_lambda_.1} parent=1 // pred_fallthru
      _
    // Predicated region
    $region82: #{_lambda_.1} parent=1 // pred_check
      _
    $region83: #{_lambda_.1} parent=1 // pred_check_branch
      %188 = sbr.rel (0) target = $region85
    $region84: #{_lambda_.1} parent=1 // pred_region
      %189 = dma.done [#allocation6], 256
    $region85: #{_lambda_.1} parent=1 // pred_fallthru
      _
    // Predicated region
    $region86: #{_lambda_.1} parent=1 // pred_check
      _
    $region87: #{_lambda_.1} parent=1 // pred_check_branch
      %191 = sbr.rel (0) target = $region89
    $region88: #{_lambda_.1} parent=1 // pred_region
      %192 = dma.done [#allocation9], 256
    $region89: #{_lambda_.1} parent=1 // pred_fallthru
      _
    // Predicated region
    $region90: #{_lambda_.1} parent=1 // pred_check
      _
    $region91: #{_lambda_.1} parent=1 // pred_check_branch
      %194 = sbr.rel (0) target = $region93
    $region92: #{_lambda_.1} parent=1 // pred_region
      %195 = dma.done [#allocation9], 1024
    $region93: #{_lambda_.1} parent=1 // pred_fallthru
      _
    // Predicated region
    $region94: #{_lambda_.1} parent=1 // pred_check
      _
    $region95: #{_lambda_.1} parent=1 // pred_check_branch
      %197 = sbr.rel (0) target = $region97
    $region96: #{_lambda_.1} parent=1 // pred_region
      %198 = dma.done [#allocation12], 48
    $region97: #{_lambda_.1} parent=1 // pred_fallthru
      _
    // Predicated region
    $region98: #{_lambda_.1} parent=1 // pred_check
      _
    $region99: #{_lambda_.1} parent=1 // pred_check_branch
      %200 = sbr.rel (0) target = $region101
    $region100: #{_lambda_.1} parent=1 // pred_region
      %201 = dma.done [#allocation12], 16
    $region101: #{_lambda_.1} parent=1 // pred_fallthru
      _
    // Predicated region
    $region102: #{_lambda_.1} parent=1 // pred_check
      _
    $region103: #{_lambda_.1} parent=1 // pred_check_branch
      %203 = sbr.rel (0) target = $region105
    $region104: #{_lambda_.1} parent=1 // pred_region
      %204 = dma.done [#allocation15], 16
    $region105: #{_lambda_.1} parent=1 // pred_fallthru
      _
    // Predicated region
    $region106: #{_lambda_.1} parent=1 // pred_check
      _
    $region107: #{_lambda_.1} parent=1 // pred_check_branch
      %206 = sbr.rel (0) target = $region109
    $region108: #{_lambda_.1} parent=1 // pred_region
      %207 = dma.done [#allocation15], 16
    $region109: #{_lambda_.1} parent=1 // pred_fallthru
      _
    // Predicated region
    $region110: #{_lambda_.1} parent=1 // pred_check
      _
    $region111: #{_lambda_.1} parent=1 // pred_check_branch
      %209 = sbr.rel (0) target = $region113
    $region112: #{_lambda_.1} parent=1 // pred_region
      %210 = dma.done [#allocation18], 16
    $region113: #{_lambda_.1} parent=1 // pred_fallthru
      _
    // Predicated region
    $region114: #{_lambda_.1} parent=1 // pred_check
      _
    $region115: #{_lambda_.1} parent=1 // pred_check_branch
      %212 = sbr.rel (0) target = $region117
    $region116: #{_lambda_.1} parent=1 // pred_region
      %213 = dma.done [#allocation18], 16
    $region117: #{_lambda_.1} parent=1 // pred_fallthru
      _
    // Predicated region
    $region118: #{_lambda_.1} parent=1 // pred_check
      _
    $region119: #{_lambda_.1} parent=1 // pred_check_branch
      %215 = sbr.rel (0) target = $region121
    $region120: #{_lambda_.1} parent=1 // pred_region
      %216 = dma.done [#allocation21], 32
    $region121: #{_lambda_.1} parent=1 // pred_fallthru
      _
    // Predicated region
    $region122: #{_lambda_.1} parent=1 // pred_check
      _
    $region123: #{_lambda_.1} parent=1 // pred_check_branch
      %218 = sbr.rel (0) target = $region125
    $region124: #{_lambda_.1} parent=1 // pred_region
      %219 = dma.done [#allocation21], 16
    $region125: #{_lambda_.1} parent=1 // pred_fallthru
      _
    %v221 = vld [vmem:[#allocation2] sm:$0xff]
    %v222 = vld [vmem:[#allocation2 + $0x8] sm:$0xff]
    %v223 = vld [vmem:[#allocation14] sm:$0x1]
    %v224 = vld [vmem:[#allocation16] sm:$0x1]
    %vm225 = vcmask 523264
    %v226 = vsel %vm225, %v221, 0.0
    %227 = vadd.xlane.f32.xlu0 %v226
    %v228 = vpop.xlane.xlu0 %227
    %v229 = vsel %vm225, %v222, 0.0
    %230 = vadd.xlane.f32.xlu0 %v229
    %v231 = vpop.xlane.xlu0 %230
    %v232 = vrcp.pop 64.0
    %v233 = vmul.f32 %v228, %v232
    %v234 = vmul.f32 %v231, %v232
    %v235 = vsub.f32 %v221, %v233
    %v236 = vsub.f32 %v222, %v234
    %v237 = vmul.f32 %v235, %v235
    %v238 = vmul.f32 %v236, %v236
    %v239 = vsel %vm225, %v237, 0.0
    %240 = vadd.xlane.f32.xlu0 %v239
    %v241 = vpop.xlane.xlu0 %240
    %v242 = vsel %vm225, %v238, 0.0
    %243 = vadd.xlane.f32.xlu0 %v242
    %v244 = vpop.xlane.xlu0 %243
    %v245 = vmul.f32 %v241, %v232
    %v246 = vmul.f32 %v244, %v232
    %v247 = vadd.f32 %v245, 1e-05
    %v248 = vadd.f32 %v246, 1e-05
    %v249 = vrsqrt.pop %v247
    %v250 = vrsqrt.pop %v248
    %v251 = vmul.f32 %v235, %v249
    %v252 = vmul.f32 %v236, %v250
    %v254 = vlaneseq
    %v255 = vshrl.u32 %v254, 7
    %v256 = vsub.s32 0, %v255
    %v257 = vrot.slane %v223, %v256
    %v259 = vmul.f32 %v251, %v257
    %v260 = vmul.f32 %v252, %v257
    %v262 = vlaneseq
    %v263 = vshrl.u32 %v262, 7
    %v264 = vsub.s32 0, %v263
    %v265 = vrot.slane %v224, %v264
    %v267 = vadd.f32 %v259, %v265
    %v268 = vadd.f32 %v260, %v265
    %v269 = vpack.c.bf16 %v268, %v267
    %v270 = vld [vmem:[%s6] sm:$0xff]
    %v271 = vld [vmem:[%s6 + $0x8] sm:$0xf]
    %v272 = vld [vmem:[%s6 + $0xc] sm:$0xff]
    %v273 = vld [vmem:[%s6 + $0x14] sm:$0xf]
    %v274 = vld [vmem:[%s6 + $0x18] sm:$0xff]
    %v275 = vld [vmem:[%s6 + $0x20] sm:$0xf]
    %v276 = vld [vmem:[%s6 + $0x24] sm:$0xff]
    %v277 = vld [vmem:[%s6 + $0x2c] sm:$0xf]
    %v278 = vld [vmem:[%s6 + $0x30] sm:$0xff]
    %v279 = vld [vmem:[%s6 + $0x38] sm:$0xf]
    %v280 = vld [vmem:[%s6 + $0x3c] sm:$0xff]
    %v281 = vld [vmem:[%s6 + $0x44] sm:$0xf]
    %v282 = vld [vmem:[%s6 + $0x48] sm:$0xff]
    %v283 = vld [vmem:[%s6 + $0x50] sm:$0xf]
    %v284 = vld [vmem:[%s6 + $0x54] sm:$0xff]
    %v285 = vld [vmem:[%s6 + $0x5c] sm:$0xf]
    %v286 = vld [vmem:[#allocation11] sm:$0x7]
    %v288 = vlaneseq
    %v289 = vshrl.u32 %v288, 7
    %v290 = vsub.s32 0, %v289
    %v291 = vrot.slane %v286, %v290
    %v292 = vlaneseq
    %v293 = vshrl.u32 %v292, 7
    %v294 = vsub.s32 1, %v293
    %v295 = vrot.slane %v286, %v294
    %v296 = vlaneseq
    %v297 = vshrl.u32 %v296, 7
    %v298 = vsub.s32 2, %v297
    %v299 = vrot.slane %v286, %v298
    %v319 = vunpack.c.l.b16 %v270
    %v320 = vunpack.c.h.b16 %v270
    %v321 = vunpack.c.l.b16 %v271
    %v322 = vunpack.c.l.b16 %v272
    %v323 = vunpack.c.h.b16 %v272
    %v324 = vunpack.c.l.b16 %v273
    %v325 = vunpack.c.l.b16 %v274
    %v326 = vunpack.c.h.b16 %v274
    %v327 = vunpack.c.l.b16 %v275
    %v328 = vunpack.c.l.b16 %v276
    %v329 = vunpack.c.h.b16 %v276
    %v330 = vunpack.c.l.b16 %v277
    %v331 = vunpack.c.l.b16 %v278
    %v332 = vunpack.c.h.b16 %v278
    %v333 = vunpack.c.l.b16 %v279
    %v334 = vunpack.c.l.b16 %v280
    %v335 = vunpack.c.h.b16 %v280
    %v336 = vunpack.c.l.b16 %v281
    %v337 = vunpack.c.l.b16 %v282
    %v338 = vunpack.c.h.b16 %v282
    %v339 = vunpack.c.l.b16 %v283
    %v340 = vunpack.c.l.b16 %v284
    %v341 = vunpack.c.h.b16 %v284
    %v342 = vunpack.c.l.b16 %v285
    %v343 = vpack.c.b16 %v322, %v319
    %v344 = vpack.c.b16 %v323, %v320
    %v345 = vpack.c.b16 %v324, %v321
    %v346 = vpack.c.b16 %v328, %v325
    %v347 = vpack.c.b16 %v329, %v326
    %v348 = vpack.c.b16 %v330, %v327
    %v349 = vpack.c.b16 %v334, %v331
    %v350 = vpack.c.b16 %v335, %v332
    %v351 = vpack.c.b16 %v336, %v333
    %v352 = vpack.c.b16 %v340, %v337
    %v353 = vpack.c.b16 %v341, %v338
    %v354 = vpack.c.b16 %v342, %v339
    %v368 = vsel %vm225, %v269, 0
    %370 = vmatprep.subr.bf16.mxu0 %v344
    %371 = vmatpush1.bf16.msra.mxu0 %v343
    %372 = vmatprep.subr.bf16.mxu0 %v347
    %373 = vmatpush1.bf16.msra.mxu0 %v346
    %374 = vmatprep.subr.bf16.mxu0 %v350
    %375 = vmatpush1.bf16.msra.mxu0 %v349
    %376 = vmatprep.subr.bf16.mxu0 %v353
    %377 = vmatpush1.bf16.msra.mxu0 %v352
    %378 = vmatprep.subr.bf16.mxu0 0
    %379 = vmatpush1.bf16.msra.mxu0 0
    %380 = vmatprep.subr.bf16.mxu0 0
    %381 = vmatpush1.bf16.msra.mxu0 0
    %382 = vmatprep.subr.bf16.mxu0 0
    %383 = vmatpush1.bf16.msra.mxu0 0
    %384 = vmatprep.subr.bf16.mxu0 0
    %385 = vmatpush1.bf16.msra.mxu0 0
    %386 = vmatprep.subr.bf16.mxu0 0
    %387 = vmatpush1.bf16.msra.mxu0 0
    %388 = vmatprep.subr.bf16.mxu0 0
    %389 = vmatpush1.bf16.msra.mxu0 0
    %390 = vmatprep.subr.bf16.mxu0 0
    %391 = vmatpush1.bf16.msra.mxu0 0
    %392 = vmatprep.subr.bf16.mxu0 0
    %393 = vmatpush1.bf16.msra.mxu0 0
    %394 = vmatprep.subr.bf16.mxu0 0
    %395 = vmatpush1.bf16.msra.mxu0 0
    %396 = vmatprep.subr.bf16.mxu0 0
    %397 = vmatpush1.bf16.msra.mxu0 0
    %398 = vmatprep.subr.bf16.mxu0 0
    %399 = vmatpush1.bf16.msra.mxu0 0
    %400 = vmatprep.subr.bf16.mxu0 0
    %401 = vmatpush1.bf16.msra.mxu0 0
    %402 = vmatprep.mubr.bf16.mxu0 0
    %403 = vmatmul.mubr.bf16.gmra.mrb[0].mxu0 %v368
    %v404 = vpop.f32.mrb[0].mxu0
    %v405 = vadd.f32 %v291, %v404
    %v406 = vpop.f32.mrb[0].mxu0
    %v407 = vadd.f32 %v295, %v406
    %v408 = vpop.f32.mrb[0].mxu0
    %v409 = vadd.f32 %v291, %v408
    %v410 = vpop.f32.mrb[0].mxu0
    %v411 = vadd.f32 %v295, %v410
    %412 = vdwg.mxu0
    %413 = vmatprep.subr.bf16.mxu0 0
    %414 = vmatpush1.bf16.msra.mxu0 %v345
    %415 = vmatprep.subr.bf16.mxu0 0
    %416 = vmatpush1.bf16.msra.mxu0 %v348
    %417 = vmatprep.subr.bf16.mxu0 0
    %418 = vmatpush1.bf16.msra.mxu0 %v351
    %419 = vmatprep.subr.bf16.mxu0 0
    %420 = vmatpush1.bf16.msra.mxu0 %v354
    %421 = vmatprep.subr.bf16.mxu0 0
    %422 = vmatpush1.bf16.msra.mxu0 0
    %423 = vmatprep.subr.bf16.mxu0 0
    %424 = vmatpush1.bf16.msra.mxu0 0
    %425 = vmatprep.subr.bf16.mxu0 0
    %426 = vmatpush1.bf16.msra.mxu0 0
    %427 = vmatprep.subr.bf16.mxu0 0
    %428 = vmatpush1.bf16.msra.mxu0 0
    %429 = vmatprep.subr.bf16.mxu0 0
    %430 = vmatpush1.bf16.msra.mxu0 0
    %431 = vmatprep.subr.bf16.mxu0 0
    %432 = vmatpush1.bf16.msra.mxu0 0
    %433 = vmatprep.subr.bf16.mxu0 0
    %434 = vmatpush1.bf16.msra.mxu0 0
    %435 = vmatprep.subr.bf16.mxu0 0
    %436 = vmatpush1.bf16.msra.mxu0 0
    %437 = vmatprep.subr.bf16.mxu0 0
    %438 = vmatpush1.bf16.msra.mxu0 0
    %439 = vmatprep.subr.bf16.mxu0 0
    %440 = vmatpush1.bf16.msra.mxu0 0
    %441 = vmatprep.subr.bf16.mxu0 0
    %442 = vmatpush1.bf16.msra.mxu0 0
    %443 = vmatprep.subr.bf16.mxu0 0
    %444 = vmatpush1.bf16.msra.mxu0 0
    %445 = vmatprep.mubr.bf16.mxu0 0
    %446 = vmatmul.mubr.bf16.gmra.mrb[0].mxu0 %v368
    %v447 = vpop.f32.mrb[0].mxu0
    %v448 = vadd.f32 %v299, %v447
    %v449 = vpop.f32.mrb[0].mxu0
    %v450 = vpop.f32.mrb[0].mxu0
    %v451 = vadd.f32 %v299, %v450
    %v452 = vpop.f32.mrb[0].mxu0
    %453 = vdwg.mxu0
    %v454 = vld [vmem:[#allocation7] sm:$0xff]
    %v455 = vld [vmem:[#allocation7 + $0x8] sm:$0xff]
    %v456 = vmul.f32 %v405, %v454
    %v457 = vmul.f32 %v409, %v455
    %v458 = vld [vmem:[#allocation8] sm:$0xff]
    %v459 = vld [vmem:[#allocation8 + $0x8] sm:$0xff]
    %v460 = vmul.f32 %v407, %v458
    %v461 = vmul.f32 %v411, %v459
    %v462 = vadd.f32 %v456, %v460
    %v463 = vadd.f32 %v457, %v461
    %v464 = vld [vmem:[%s4] sm:$0xff]
    %v465 = vld [vmem:[%s4 + $0x8] sm:$0xff]
    %v466 = vld [vmem:[%s4 + $0x10] sm:$0xff]
    %v467 = vld [vmem:[%s4 + $0x18] sm:$0xff]
    %v468 = vld [vmem:[%s4 + $0x20] sm:$0xff]
    %v469 = vld [vmem:[%s4 + $0x28] sm:$0xff]
    %v470 = vld [vmem:[%s4 + $0x30] sm:$0xff]
    %v471 = vld [vmem:[%s4 + $0x38] sm:$0xff]
    %v472 = vld [vmem:[%s4 + $0x40] sm:$0xff]
    %v473 = vld [vmem:[%s4 + $0x48] sm:$0xff]
    %v474 = vld [vmem:[%s4 + $0x50] sm:$0xff]
    %v475 = vld [vmem:[%s4 + $0x58] sm:$0xff]
    %v476 = vld [vmem:[%s4 + $0x60] sm:$0xff]
    %v477 = vld [vmem:[%s4 + $0x68] sm:$0xff]
    %v478 = vld [vmem:[%s4 + $0x70] sm:$0xff]
    %v479 = vld [vmem:[%s4 + $0x78] sm:$0xff]
    %496 = vrot.lane.b32.xlu0 %v464, 64
    %v497 = vpop.permute.xlu0 %496
    %498 = vrot.lane.b32.xlu0 %v465, 64
    %v499 = vpop.permute.xlu0 %498
    %500 = vrot.lane.b32.xlu0 %v466, 64
    %v501 = vpop.permute.xlu0 %500
    %502 = vrot.lane.b32.xlu0 %v467, 64
    %v503 = vpop.permute.xlu0 %502
    %504 = vrot.lane.b32.xlu0 %v468, 64
    %v505 = vpop.permute.xlu0 %504
    %506 = vrot.lane.b32.xlu0 %v469, 64
    %v507 = vpop.permute.xlu0 %506
    %508 = vrot.lane.b32.xlu0 %v470, 64
    %v509 = vpop.permute.xlu0 %508
    %510 = vrot.lane.b32.xlu0 %v471, 64
    %v511 = vpop.permute.xlu0 %510
    %512 = vrot.lane.b32.xlu0 %v472, 64
    %v513 = vpop.permute.xlu0 %512
    %514 = vrot.lane.b32.xlu0 %v473, 64
    %v515 = vpop.permute.xlu0 %514
    %516 = vrot.lane.b32.xlu0 %v474, 64
    %v517 = vpop.permute.xlu0 %516
    %518 = vrot.lane.b32.xlu0 %v475, 64
    %v519 = vpop.permute.xlu0 %518
    %520 = vrot.lane.b32.xlu0 %v476, 64
    %v521 = vpop.permute.xlu0 %520
    %522 = vrot.lane.b32.xlu0 %v477, 64
    %v523 = vpop.permute.xlu0 %522
    %524 = vrot.lane.b32.xlu0 %v478, 64
    %v525 = vpop.permute.xlu0 %524
    %526 = vrot.lane.b32.xlu0 %v479, 64
    %v527 = vpop.permute.xlu0 %526
    %v544 = vmul.f32 %v462, %v497
    %v545 = vmul.f32 %v463, %v499
    %v546 = vmul.f32 %v462, %v501
    %v547 = vmul.f32 %v463, %v503
    %v548 = vmul.f32 %v462, %v505
    %v549 = vmul.f32 %v463, %v507
    %v550 = vmul.f32 %v462, %v509
    %v551 = vmul.f32 %v463, %v511
    %v552 = vmul.f32 %v462, %v513
    %v553 = vmul.f32 %v463, %v515
    %v554 = vmul.f32 %v462, %v517
    %v555 = vmul.f32 %v463, %v519
    %v556 = vmul.f32 %v462, %v521
    %v557 = vmul.f32 %v463, %v523
    %v558 = vmul.f32 %v462, %v525
    %v559 = vmul.f32 %v463, %v527
    %v560 = vpack.c.bf16 %v545, %v544
    %v561 = vpack.c.bf16 %v547, %v546
    %v562 = vpack.c.bf16 %v549, %v548
    %v563 = vpack.c.bf16 %v551, %v550
    %v564 = vpack.c.bf16 %v553, %v552
    %v565 = vpack.c.bf16 %v555, %v554
    %v566 = vpack.c.bf16 %v557, %v556
    %v567 = vpack.c.bf16 %v559, %v558
    %v568 = vmul.f32 %v448, %v464
    %v569 = vmul.f32 %v451, %v465
    %v570 = vmul.f32 %v448, %v466
    %v571 = vmul.f32 %v451, %v467
    %v572 = vmul.f32 %v448, %v468
    %v573 = vmul.f32 %v451, %v469
    %v574 = vmul.f32 %v448, %v470
    %v575 = vmul.f32 %v451, %v471
    %v576 = vmul.f32 %v448, %v472
    %v577 = vmul.f32 %v451, %v473
    %v578 = vmul.f32 %v448, %v474
    %v579 = vmul.f32 %v451, %v475
    %v580 = vmul.f32 %v448, %v476
    %v581 = vmul.f32 %v451, %v477
    %v582 = vmul.f32 %v448, %v478
    %v583 = vmul.f32 %v451, %v479
    %v584 = vpack.c.bf16 %v569, %v568
    %v585 = vpack.c.bf16 %v571, %v570
    %v586 = vpack.c.bf16 %v573, %v572
    %v587 = vpack.c.bf16 %v575, %v574
    %v588 = vpack.c.bf16 %v577, %v576
    %v589 = vpack.c.bf16 %v579, %v578
    %v590 = vpack.c.bf16 %v581, %v580
    %v591 = vpack.c.bf16 %v583, %v582
    %v592 = vpack.c.bf16 %v463, %v462
    %v593 = vld [vmem:[#allocation5] sm:$0xff]
    %v594 = vld [vmem:[#allocation5 + $0x8] sm:$0xff]
    %603 = vrot.lane.b32.xlu0 %v560, 64
    %v604 = vpop.permute.xlu0 %603
    %605 = vrot.lane.b32.xlu0 %v561, 64
    %v606 = vpop.permute.xlu0 %605
    %607 = vrot.lane.b32.xlu0 %v562, 64
    %v608 = vpop.permute.xlu0 %607
    %609 = vrot.lane.b32.xlu0 %v563, 64
    %v610 = vpop.permute.xlu0 %609
    %611 = vrot.lane.b32.xlu0 %v564, 64
    %v612 = vpop.permute.xlu0 %611
    %613 = vrot.lane.b32.xlu0 %v565, 64
    %v614 = vpop.permute.xlu0 %613
    %615 = vrot.lane.b32.xlu0 %v566, 64
    %v616 = vpop.permute.xlu0 %615
    %617 = vrot.lane.b32.xlu0 %v567, 64
    %v618 = vpop.permute.xlu0 %617
    %v620 = vsel %vm225, %v592, 0
    %v623 = vsel %vm225, %v604, 0
    %v626 = vsel %vm225, %v606, 0
    %v629 = vsel %vm225, %v608, 0
    %v632 = vsel %vm225, %v610, 0
    %v635 = vsel %vm225, %v612, 0
    %v638 = vsel %vm225, %v614, 0
    %v641 = vsel %vm225, %v616, 0
    %v644 = vsel %vm225, %v618, 0
    %646 = vmatprep.subr.bf16.mxu0 0
    %647 = vmatpush1.bf16.xpose.msra.mxu0 %v623
    %648 = vmatprep.subr.bf16.mxu0 0
    %649 = vmatpush1.bf16.xpose.msra.mxu0 %v626
    %650 = vmatprep.subr.bf16.mxu0 0
    %651 = vmatpush1.bf16.xpose.msra.mxu0 %v629
    %652 = vmatprep.subr.bf16.mxu0 0
    %653 = vmatpush1.bf16.xpose.msra.mxu0 %v632
    %654 = vmatprep.subr.bf16.mxu0 0
    %655 = vmatpush1.bf16.xpose.msra.mxu0 %v635
    %656 = vmatprep.subr.bf16.mxu0 0
    %657 = vmatpush1.bf16.xpose.msra.mxu0 %v638
    %658 = vmatprep.subr.bf16.mxu0 0
    %659 = vmatpush1.bf16.xpose.msra.mxu0 %v641
    %660 = vmatprep.subr.bf16.mxu0 0
    %661 = vmatpush1.bf16.xpose.msra.mxu0 %v644
    %662 = vmatprep.subr.bf16.mxu0 0
    %663 = vmatpush1.bf16.xpose.msra.mxu0 0
    %664 = vmatprep.subr.bf16.mxu0 0
    %665 = vmatpush1.bf16.xpose.msra.mxu0 0
    %666 = vmatprep.subr.bf16.mxu0 0
    %667 = vmatpush1.bf16.xpose.msra.mxu0 0
    %668 = vmatprep.subr.bf16.mxu0 0
    %669 = vmatpush1.bf16.xpose.msra.mxu0 0
    %670 = vmatprep.subr.bf16.mxu0 0
    %671 = vmatpush1.bf16.xpose.msra.mxu0 0
    %672 = vmatprep.subr.bf16.mxu0 0
    %673 = vmatpush1.bf16.xpose.msra.mxu0 0
    %674 = vmatprep.subr.bf16.mxu0 0
    %675 = vmatpush1.bf16.xpose.msra.mxu0 0
    %676 = vmatprep.subr.bf16.mxu0 0
    %677 = vmatpush1.bf16.xpose.msra.mxu0 0
    %678 = vmatprep.mubr.bf16.mxu0 0
    %679 = vmatmul.mubr.bf16.gmra.mrb[0].mxu0 %v620
    %v680 = vpop.f32.mrb[0].mxu0
    %v681 = vadd.f32 %v593, %v680
    %v682 = vpop.f32.mrb[0].mxu0
    %v683 = vpop.f32.mrb[0].mxu0
    %v684 = vadd.f32 %v594, %v683
    %v685 = vpop.f32.mrb[0].mxu0
    %686 = vdwg.mxu0
    %687 = vmax.xlane.f32.xlu0 %v681
    %v688 = vpop.xlane.xlu0 %687
    %689 = vmax.xlane.f32.xlu0 %v684
    %v690 = vpop.xlane.xlu0 %689
    %v691 = vsub.f32 %v681, %v688
    %v692 = vsub.f32 %v684, %v690
    %v693 = vmul.f32 %v691, 1.442695
    %v694 = vpow.pop %v693
    %v695 = vmul.f32 %v692, 1.442695
    %v696 = vpow.pop %v695
    %v697 = vpack.c.bf16 %v696, %v694
    %698 = vmatprep.subr.bf16.mxu0 0
    %699 = vmatpush1.bf16.msra.mxu0 %v584
    %700 = vmatprep.subr.bf16.mxu0 0
    %701 = vmatpush1.bf16.msra.mxu0 %v585
    %702 = vmatprep.subr.bf16.mxu0 0
    %703 = vmatpush1.bf16.msra.mxu0 %v586
    %704 = vmatprep.subr.bf16.mxu0 0
    %705 = vmatpush1.bf16.msra.mxu0 %v587
    %706 = vmatprep.subr.bf16.mxu0 0
    %707 = vmatpush1.bf16.msra.mxu0 %v588
    %708 = vmatprep.subr.bf16.mxu0 0
    %709 = vmatpush1.bf16.msra.mxu0 %v589
    %710 = vmatprep.subr.bf16.mxu0 0
    %711 = vmatpush1.bf16.msra.mxu0 %v590
    %712 = vmatprep.subr.bf16.mxu0 0
    %713 = vmatpush1.bf16.msra.mxu0 %v591
    %714 = vmatprep.subr.bf16.mxu0 0
    %715 = vmatpush1.bf16.msra.mxu0 0
    %716 = vmatprep.subr.bf16.mxu0 0
    %717 = vmatpush1.bf16.msra.mxu0 0
    %718 = vmatprep.subr.bf16.mxu0 0
    %719 = vmatpush1.bf16.msra.mxu0 0
    %720 = vmatprep.subr.bf16.mxu0 0
    %721 = vmatpush1.bf16.msra.mxu0 0
    %722 = vmatprep.subr.bf16.mxu0 0
    %723 = vmatpush1.bf16.msra.mxu0 0
    %724 = vmatprep.subr.bf16.mxu0 0
    %725 = vmatpush1.bf16.msra.mxu0 0
    %726 = vmatprep.subr.bf16.mxu0 0
    %727 = vmatpush1.bf16.msra.mxu0 0
    %728 = vmatprep.subr.bf16.mxu0 0
    %729 = vmatpush1.bf16.msra.mxu0 0
    %730 = vmatprep.mubr.bf16.mxu0 0
    %731 = vmatmul.mubr.bf16.gmra.mrb[0].mxu0 %v697
    %v732 = vpop.f32.mrb[0].mxu0
    %v733 = vadd.f32 0.0, %v732
    %v734 = vpop.f32.mrb[0].mxu0
    %v735 = vpop.f32.mrb[0].mxu0
    %v736 = vadd.f32 0.0, %v735
    %v737 = vpop.f32.mrb[0].mxu0
    %738 = vdwg.mxu0
    %v739 = vld [vmem:[#allocation10] sm:$0xf]
    %v740 = vld [vmem:[#allocation10 + $0x4] sm:$0xf]
    %v741 = vld [vmem:[#allocation10 + $0x8] sm:$0xf]
    %v742 = vld [vmem:[#allocation10 + $0xc] sm:$0xf]
    %v743 = vld [vmem:[#allocation10 + $0x10] sm:$0xf]
    %v744 = vld [vmem:[#allocation10 + $0x14] sm:$0xf]
    %v745 = vld [vmem:[#allocation10 + $0x18] sm:$0xf]
    %v746 = vld [vmem:[#allocation10 + $0x1c] sm:$0xf]
    %v747 = vld [vmem:[#allocation10 + $0x20] sm:$0xf]
    %v748 = vld [vmem:[#allocation10 + $0x24] sm:$0xf]
    %v749 = vld [vmem:[#allocation10 + $0x28] sm:$0xf]
    %v750 = vld [vmem:[#allocation10 + $0x2c] sm:$0xf]
    %v751 = vld [vmem:[#allocation10 + $0x30] sm:$0xf]
    %v752 = vld [vmem:[#allocation10 + $0x34] sm:$0xf]
    %v753 = vld [vmem:[#allocation10 + $0x38] sm:$0xf]
    %v754 = vld [vmem:[#allocation10 + $0x3c] sm:$0xf]
    %v771 = vunpack.c.l.b16 %v739
    %v772 = vunpack.c.l.b16 %v740
    %v773 = vunpack.c.l.b16 %v741
    %v774 = vunpack.c.l.b16 %v742
    %v775 = vunpack.c.l.b16 %v743
    %v776 = vunpack.c.l.b16 %v744
    %v777 = vunpack.c.l.b16 %v745
    %v778 = vunpack.c.l.b16 %v746
    %v779 = vunpack.c.l.b16 %v747
    %v780 = vunpack.c.l.b16 %v748
    %v781 = vunpack.c.l.b16 %v749
    %v782 = vunpack.c.l.b16 %v750
    %v783 = vunpack.c.l.b16 %v751
    %v784 = vunpack.c.l.b16 %v752
    %v785 = vunpack.c.l.b16 %v753
    %v786 = vunpack.c.l.b16 %v754
    %v787 = vpack.c.b16 %v772, %v771
    %v788 = vpack.c.b16 %v774, %v773
    %v789 = vpack.c.b16 %v776, %v775
    %v790 = vpack.c.b16 %v778, %v777
    %v791 = vpack.c.b16 %v780, %v779
    %v792 = vpack.c.b16 %v782, %v781
    %v793 = vpack.c.b16 %v784, %v783
    %v794 = vpack.c.b16 %v786, %v785
    %803 = vmatprep.subr.bf16.mxu0 0
    %804 = vmatpush1.bf16.msra.mxu0 %v787
    %805 = vmatprep.subr.bf16.mxu0 0
    %806 = vmatpush1.bf16.msra.mxu0 %v788
    %807 = vmatprep.subr.bf16.mxu0 0
    %808 = vmatpush1.bf16.msra.mxu0 %v789
    %809 = vmatprep.subr.bf16.mxu0 0
    %810 = vmatpush1.bf16.msra.mxu0 %v790
    %811 = vmatprep.subr.bf16.mxu0 0
    %812 = vmatpush1.bf16.msra.mxu0 %v791
    %813 = vmatprep.subr.bf16.mxu0 0
    %814 = vmatpush1.bf16.msra.mxu0 %v792
    %815 = vmatprep.subr.bf16.mxu0 0
    %816 = vmatpush1.bf16.msra.mxu0 %v793
    %817 = vmatprep.subr.bf16.mxu0 0
    %818 = vmatpush1.bf16.msra.mxu0 %v794
    %819 = vmatprep.subr.bf16.mxu0 0
    %820 = vmatpush1.bf16.msra.mxu0 0
    %821 = vmatprep.subr.bf16.mxu0 0
    %822 = vmatpush1.bf16.msra.mxu0 0
    %823 = vmatprep.subr.bf16.mxu0 0
    %824 = vmatpush1.bf16.msra.mxu0 0
    %825 = vmatprep.subr.bf16.mxu0 0
    %826 = vmatpush1.bf16.msra.mxu0 0
    %827 = vmatprep.subr.bf16.mxu0 0
    %828 = vmatpush1.bf16.msra.mxu0 0
    %829 = vmatprep.subr.bf16.mxu0 0
    %830 = vmatpush1.bf16.msra.mxu0 0
    %831 = vmatprep.subr.bf16.mxu0 0
    %832 = vmatpush1.bf16.msra.mxu0 0
    %833 = vmatprep.subr.bf16.mxu0 0
    %834 = vmatpush1.bf16.msra.mxu0 0
    %835 = vmatprep.mubr.bf16.mxu0 0
    %836 = vmatmul.mubr.bf16.gmra.mrb[0].mxu0 %v697
    %v837 = vpop.f32.mrb[0].mxu0
    %v838 = vadd.f32 0.0, %v837
    %v839 = vpop.f32.mrb[0].mxu0
    %v840 = vpop.f32.mrb[0].mxu0
    %v841 = vadd.f32 0.0, %v840
    %v842 = vpop.f32.mrb[0].mxu0
    %843 = vdwg.mxu0
    %v844 = vmax.f32 %v838, 1e-30
    %v845 = vmax.f32 %v841, 1e-30
    %v846 = vrcp.pop %v844
    %v847 = vrcp.pop %v845
    %v848 = vmul.f32 %v733, %v846
    %v849 = vmul.f32 %v736, %v847
    %v850 = vpack.c.bf16 %v849, %v848
    %v851 = vld [vmem:[%s8] sm:$0xf]
    %v852 = vld [vmem:[%s8 + $0x4] sm:$0xf]
    %v853 = vld [vmem:[%s8 + $0x8] sm:$0xf]
    %v854 = vld [vmem:[%s8 + $0xc] sm:$0xf]
    %v855 = vld [vmem:[%s8 + $0x10] sm:$0xf]
    %v856 = vld [vmem:[%s8 + $0x14] sm:$0xf]
    %v857 = vld [vmem:[%s8 + $0x18] sm:$0xf]
    %v858 = vld [vmem:[%s8 + $0x1c] sm:$0xf]
    %v859 = vld [vmem:[#allocation13] sm:$0x1]
    %v861 = vlaneseq
    %v862 = vshrl.u32 %v861, 7
    %v863 = vsub.s32 0, %v862
    %v864 = vrot.slane %v859, %v863
    %v874 = vunpack.c.l.b16 %v851
    %v875 = vunpack.c.l.b16 %v852
    %v876 = vunpack.c.l.b16 %v853
    %v877 = vunpack.c.l.b16 %v854
    %v878 = vunpack.c.l.b16 %v855
    %v879 = vunpack.c.l.b16 %v856
    %v880 = vunpack.c.l.b16 %v857
    %v881 = vunpack.c.l.b16 %v858
    %v882 = vpack.c.b16 %v875, %v874
    %v883 = vpack.c.b16 %v877, %v876
    %v884 = vpack.c.b16 %v879, %v878
    %v885 = vpack.c.b16 %v881, %v880
    %v891 = vsel %vm225, %v850, 0
    %893 = vmatprep.subr.bf16.mxu0 0
    %894 = vmatpush1.bf16.msra.mxu0 %v882
    %895 = vmatprep.subr.bf16.mxu0 0
    %896 = vmatpush1.bf16.msra.mxu0 %v883
    %897 = vmatprep.subr.bf16.mxu0 0
    %898 = vmatpush1.bf16.msra.mxu0 %v884
    %899 = vmatprep.subr.bf16.mxu0 0
    %900 = vmatpush1.bf16.msra.mxu0 %v885
    %901 = vmatprep.subr.bf16.mxu0 0
    %902 = vmatpush1.bf16.msra.mxu0 0
    %903 = vmatprep.subr.bf16.mxu0 0
    %904 = vmatpush1.bf16.msra.mxu0 0
    %905 = vmatprep.subr.bf16.mxu0 0
    %906 = vmatpush1.bf16.msra.mxu0 0
    %907 = vmatprep.subr.bf16.mxu0 0
    %908 = vmatpush1.bf16.msra.mxu0 0
    %909 = vmatprep.subr.bf16.mxu0 0
    %910 = vmatpush1.bf16.msra.mxu0 0
    %911 = vmatprep.subr.bf16.mxu0 0
    %912 = vmatpush1.bf16.msra.mxu0 0
    %913 = vmatprep.subr.bf16.mxu0 0
    %914 = vmatpush1.bf16.msra.mxu0 0
    %915 = vmatprep.subr.bf16.mxu0 0
    %916 = vmatpush1.bf16.msra.mxu0 0
    %917 = vmatprep.subr.bf16.mxu0 0
    %918 = vmatpush1.bf16.msra.mxu0 0
    %919 = vmatprep.subr.bf16.mxu0 0
    %920 = vmatpush1.bf16.msra.mxu0 0
    %921 = vmatprep.subr.bf16.mxu0 0
    %922 = vmatpush1.bf16.msra.mxu0 0
    %923 = vmatprep.subr.bf16.mxu0 0
    %924 = vmatpush1.bf16.msra.mxu0 0
    %925 = vmatprep.mubr.bf16.mxu0 0
    %926 = vmatmul.mubr.bf16.gmra.mrb[0].mxu0 %v891
    %v927 = vpop.f32.mrb[0].mxu0
    %v928 = vadd.f32 %v864, %v927
    %v929 = vpop.f32.mrb[0].mxu0
    %v930 = vpop.f32.mrb[0].mxu0
    %v931 = vadd.f32 %v864, %v930
    %v932 = vpop.f32.mrb[0].mxu0
    %933 = vdwg.mxu0
    %v934 = vadd.f32 %v221, %v928
    %v935 = vadd.f32 %v222, %v931
    %v936 = vld [vmem:[#allocation17] sm:$0x1]
    %v937 = vld [vmem:[#allocation19] sm:$0x1]
    %v938 = vsel %vm225, %v934, 0.0
    %939 = vadd.xlane.f32.xlu0 %v938
    %v940 = vpop.xlane.xlu0 %939
    %v941 = vsel %vm225, %v935, 0.0
    %942 = vadd.xlane.f32.xlu0 %v941
    %v943 = vpop.xlane.xlu0 %942
    %v944 = vmul.f32 %v940, %v232
    %v945 = vmul.f32 %v943, %v232
    %v946 = vsub.f32 %v934, %v944
    %v947 = vsub.f32 %v935, %v945
    %v948 = vmul.f32 %v946, %v946
    %v949 = vmul.f32 %v947, %v947
    %v950 = vsel %vm225, %v948, 0.0
    %951 = vadd.xlane.f32.xlu0 %v950
    %v952 = vpop.xlane.xlu0 %951
    %v953 = vsel %vm225, %v949, 0.0
    %954 = vadd.xlane.f32.xlu0 %v953
    %v955 = vpop.xlane.xlu0 %954
    %v956 = vmul.f32 %v952, %v232
    %v957 = vmul.f32 %v955, %v232
    %v958 = vadd.f32 %v956, 1e-05
    %v959 = vadd.f32 %v957, 1e-05
    %v960 = vrsqrt.pop %v958
    %v961 = vrsqrt.pop %v959
    %v962 = vmul.f32 %v946, %v960
    %v963 = vmul.f32 %v947, %v961
    %v965 = vlaneseq
    %v966 = vshrl.u32 %v965, 7
    %v967 = vsub.s32 0, %v966
    %v968 = vrot.slane %v936, %v967
    %v970 = vmul.f32 %v962, %v968
    %v971 = vmul.f32 %v963, %v968
    %v973 = vlaneseq
    %v974 = vshrl.u32 %v973, 7
    %v975 = vsub.s32 0, %v974
    %v976 = vrot.slane %v937, %v975
    %v978 = vadd.f32 %v970, %v976
    %v979 = vadd.f32 %v971, %v976
    %v980 = vpack.c.bf16 %v979, %v978
    %v981 = vld [vmem:[%s14] sm:$0xff]
    %v982 = vld [vmem:[%s14 + $0x8] sm:$0xff]
    %v983 = vld [vmem:[%s14 + $0x10] sm:$0xff]
    %v984 = vld [vmem:[%s14 + $0x18] sm:$0xff]
    %v985 = vld [vmem:[%s14 + $0x20] sm:$0xff]
    %v986 = vld [vmem:[%s14 + $0x28] sm:$0xff]
    %v987 = vld [vmem:[%s14 + $0x30] sm:$0xff]
    %v988 = vld [vmem:[%s14 + $0x38] sm:$0xff]
    %v989 = vld [vmem:[#allocation20] sm:$0x3]
    %v991 = vlaneseq
    %v992 = vshrl.u32 %v991, 7
    %v993 = vsub.s32 0, %v992
    %v994 = vrot.slane %v989, %v993
    %v995 = vlaneseq
    %v996 = vshrl.u32 %v995, 7
    %v997 = vsub.s32 1, %v996
    %v998 = vrot.slane %v989, %v997
    %v1009 = vunpack.c.l.b16 %v981
    %v1010 = vunpack.c.h.b16 %v981
    %v1011 = vunpack.c.l.b16 %v982
    %v1012 = vunpack.c.h.b16 %v982
    %v1013 = vunpack.c.l.b16 %v983
    %v1014 = vunpack.c.h.b16 %v983
    %v1015 = vunpack.c.l.b16 %v984
    %v1016 = vunpack.c.h.b16 %v984
    %v1017 = vunpack.c.l.b16 %v985
    %v1018 = vunpack.c.h.b16 %v985
    %v1019 = vunpack.c.l.b16 %v986
    %v1020 = vunpack.c.h.b16 %v986
    %v1021 = vunpack.c.l.b16 %v987
    %v1022 = vunpack.c.h.b16 %v987
    %v1023 = vunpack.c.l.b16 %v988
    %v1024 = vunpack.c.h.b16 %v988
    %v1025 = vpack.c.b16 %v1011, %v1009
    %v1026 = vpack.c.b16 %v1012, %v1010
    %v1027 = vpack.c.b16 %v1015, %v1013
    %v1028 = vpack.c.b16 %v1016, %v1014
    %v1029 = vpack.c.b16 %v1019, %v1017
    %v1030 = vpack.c.b16 %v1020, %v1018
    %v1031 = vpack.c.b16 %v1023, %v1021
    %v1032 = vpack.c.b16 %v1024, %v1022
    %v1042 = vsel %vm225, %v980, 0
    %1044 = vmatprep.subr.bf16.mxu0 %v1026
    %1045 = vmatpush1.bf16.msra.mxu0 %v1025
    %1046 = vmatprep.subr.bf16.mxu0 %v1028
    %1047 = vmatpush1.bf16.msra.mxu0 %v1027
    %1048 = vmatprep.subr.bf16.mxu0 %v1030
    %1049 = vmatpush1.bf16.msra.mxu0 %v1029
    %1050 = vmatprep.subr.bf16.mxu0 %v1032
    %1051 = vmatpush1.bf16.msra.mxu0 %v1031
    %1052 = vmatprep.subr.bf16.mxu0 0
    %1053 = vmatpush1.bf16.msra.mxu0 0
    %1054 = vmatprep.subr.bf16.mxu0 0
    %1055 = vmatpush1.bf16.msra.mxu0 0
    %1056 = vmatprep.subr.bf16.mxu0 0
    %1057 = vmatpush1.bf16.msra.mxu0 0
    %1058 = vmatprep.subr.bf16.mxu0 0
    %1059 = vmatpush1.bf16.msra.mxu0 0
    %1060 = vmatprep.subr.bf16.mxu0 0
    %1061 = vmatpush1.bf16.msra.mxu0 0
    %1062 = vmatprep.subr.bf16.mxu0 0
    %1063 = vmatpush1.bf16.msra.mxu0 0
    %1064 = vmatprep.subr.bf16.mxu0 0
    %1065 = vmatpush1.bf16.msra.mxu0 0
    %1066 = vmatprep.subr.bf16.mxu0 0
    %1067 = vmatpush1.bf16.msra.mxu0 0
    %1068 = vmatprep.subr.bf16.mxu0 0
    %1069 = vmatpush1.bf16.msra.mxu0 0
    %1070 = vmatprep.subr.bf16.mxu0 0
    %1071 = vmatpush1.bf16.msra.mxu0 0
    %1072 = vmatprep.subr.bf16.mxu0 0
    %1073 = vmatpush1.bf16.msra.mxu0 0
    %1074 = vmatprep.subr.bf16.mxu0 0
    %1075 = vmatpush1.bf16.msra.mxu0 0
    %1076 = vmatprep.mubr.bf16.mxu0 0
    %1077 = vmatmul.mubr.bf16.gmra.mrb[0].mxu0 %v1042
    %v1078 = vpop.f32.mrb[0].mxu0
    %v1079 = vadd.f32 %v994, %v1078
    %v1080 = vpop.f32.mrb[0].mxu0
    %v1081 = vadd.f32 %v998, %v1080
    %v1082 = vpop.f32.mrb[0].mxu0
    %v1083 = vadd.f32 %v994, %v1082
    %v1084 = vpop.f32.mrb[0].mxu0
    %v1085 = vadd.f32 %v998, %v1084
    %1086 = vdwg.mxu0
    %v1087 = vmul.f32 %v1079, 0.5
    %v1088 = vmul.f32 %v1081, 0.5
    %v1089 = vmul.f32 %v1083, 0.5
    %v1090 = vmul.f32 %v1085, 0.5
    %v1091 = vmul.f32 %v1079, 0.70710677
    %v1092 = vmul.f32 %v1081, 0.70710677
    %v1093 = vmul.f32 %v1083, 0.70710677
    %v1094 = vmul.f32 %v1085, 0.70710677
    %v1095 = verf.f32.pop %v1091
    %v1096 = verf.f32.pop %v1092
    %v1097 = verf.f32.pop %v1093
    %v1098 = verf.f32.pop %v1094
    %v1099 = vadd.f32 %v1095, 1.0
    %v1100 = vadd.f32 %v1096, 1.0
    %v1101 = vadd.f32 %v1097, 1.0
    %v1102 = vadd.f32 %v1098, 1.0
    %v1103 = vmul.f32 %v1087, %v1099
    %v1104 = vmul.f32 %v1088, %v1100
    %v1105 = vmul.f32 %v1089, %v1101
    %v1106 = vmul.f32 %v1090, %v1102
    %v1107 = vpack.c.bf16 %v1105, %v1103
    %v1108 = vpack.c.bf16 %v1106, %v1104
    %v1109 = vld [vmem:[%s16] sm:$0xf]
    %v1110 = vld [vmem:[%s16 + $0x4] sm:$0xf]
    %v1111 = vld [vmem:[%s16 + $0x8] sm:$0xf]
    %v1112 = vld [vmem:[%s16 + $0xc] sm:$0xf]
    %v1113 = vld [vmem:[%s16 + $0x10] sm:$0xf]
    %v1114 = vld [vmem:[%s16 + $0x14] sm:$0xf]
    %v1115 = vld [vmem:[%s16 + $0x18] sm:$0xf]
    %v1116 = vld [vmem:[%s16 + $0x1c] sm:$0xf]
    %v1117 = vld [vmem:[%s16 + $0x20] sm:$0xf]
    %v1118 = vld [vmem:[%s16 + $0x24] sm:$0xf]
    %v1119 = vld [vmem:[%s16 + $0x28] sm:$0xf]
    %v1120 = vld [vmem:[%s16 + $0x2c] sm:$0xf]
    %v1121 = vld [vmem:[%s16 + $0x30] sm:$0xf]
    %v1122 = vld [vmem:[%s16 + $0x34] sm:$0xf]
    %v1123 = vld [vmem:[%s16 + $0x38] sm:$0xf]
    %v1124 = vld [vmem:[%s16 + $0x3c] sm:$0xf]
    %v1125 = vld [vmem:[%s16 + $0x40] sm:$0xf]
    %v1126 = vld [vmem:[%s16 + $0x44] sm:$0xf]
    %v1127 = vld [vmem:[%s16 + $0x48] sm:$0xf]
    %v1128 = vld [vmem:[%s16 + $0x4c] sm:$0xf]
    %v1129 = vld [vmem:[%s16 + $0x50] sm:$0xf]
    %v1130 = vld [vmem:[%s16 + $0x54] sm:$0xf]
    %v1131 = vld [vmem:[%s16 + $0x58] sm:$0xf]
    %v1132 = vld [vmem:[%s16 + $0x5c] sm:$0xf]
    %v1133 = vld [vmem:[%s16 + $0x60] sm:$0xf]
    %v1134 = vld [vmem:[%s16 + $0x64] sm:$0xf]
    %v1135 = vld [vmem:[%s16 + $0x68] sm:$0xf]
    %v1136 = vld [vmem:[%s16 + $0x6c] sm:$0xf]
    %v1137 = vld [vmem:[%s16 + $0x70] sm:$0xf]
    %v1138 = vld [vmem:[%s16 + $0x74] sm:$0xf]
    %v1139 = vld [vmem:[%s16 + $0x78] sm:$0xf]
    %v1140 = vld [vmem:[%s16 + $0x7c] sm:$0xf]
    %v1141 = vld [vmem:[#allocation22] sm:$0x1]
    %v1143 = vlaneseq
    %v1144 = vshrl.u32 %v1143, 7
    %v1145 = vsub.s32 0, %v1144
    %v1146 = vrot.slane %v1141, %v1145
    %v1180 = vunpack.c.l.b16 %v1109
    %v1181 = vunpack.c.l.b16 %v1110
    %v1182 = vunpack.c.l.b16 %v1111
    %v1183 = vunpack.c.l.b16 %v1112
    %v1184 = vunpack.c.l.b16 %v1113
    %v1185 = vunpack.c.l.b16 %v1114
    %v1186 = vunpack.c.l.b16 %v1115
    %v1187 = vunpack.c.l.b16 %v1116
    %v1188 = vunpack.c.l.b16 %v1117
    %v1189 = vunpack.c.l.b16 %v1118
    %v1190 = vunpack.c.l.b16 %v1119
    %v1191 = vunpack.c.l.b16 %v1120
    %v1192 = vunpack.c.l.b16 %v1121
    %v1193 = vunpack.c.l.b16 %v1122
    %v1194 = vunpack.c.l.b16 %v1123
    %v1195 = vunpack.c.l.b16 %v1124
    %v1196 = vunpack.c.l.b16 %v1125
    %v1197 = vunpack.c.l.b16 %v1126
    %v1198 = vunpack.c.l.b16 %v1127
    %v1199 = vunpack.c.l.b16 %v1128
    %v1200 = vunpack.c.l.b16 %v1129
    %v1201 = vunpack.c.l.b16 %v1130
    %v1202 = vunpack.c.l.b16 %v1131
    %v1203 = vunpack.c.l.b16 %v1132
    %v1204 = vunpack.c.l.b16 %v1133
    %v1205 = vunpack.c.l.b16 %v1134
    %v1206 = vunpack.c.l.b16 %v1135
    %v1207 = vunpack.c.l.b16 %v1136
    %v1208 = vunpack.c.l.b16 %v1137
    %v1209 = vunpack.c.l.b16 %v1138
    %v1210 = vunpack.c.l.b16 %v1139
    %v1211 = vunpack.c.l.b16 %v1140
    %v1212 = vpack.c.b16 %v1181, %v1180
    %v1213 = vpack.c.b16 %v1183, %v1182
    %v1214 = vpack.c.b16 %v1185, %v1184
    %v1215 = vpack.c.b16 %v1187, %v1186
    %v1216 = vpack.c.b16 %v1189, %v1188
    %v1217 = vpack.c.b16 %v1191, %v1190
    %v1218 = vpack.c.b16 %v1193, %v1192
    %v1219 = vpack.c.b16 %v1195, %v1194
    %v1220 = vpack.c.b16 %v1197, %v1196
    %v1221 = vpack.c.b16 %v1199, %v1198
    %v1222 = vpack.c.b16 %v1201, %v1200
    %v1223 = vpack.c.b16 %v1203, %v1202
    %v1224 = vpack.c.b16 %v1205, %v1204
    %v1225 = vpack.c.b16 %v1207, %v1206
    %v1226 = vpack.c.b16 %v1209, %v1208
    %v1227 = vpack.c.b16 %v1211, %v1210
    %1244 = vmatprep.subr.bf16.mxu0 0
    %1245 = vmatpush1.bf16.msra.mxu0 %v1212
    %1246 = vmatprep.subr.bf16.mxu0 0
    %1247 = vmatpush1.bf16.msra.mxu0 %v1213
    %1248 = vmatprep.subr.bf16.mxu0 0
    %1249 = vmatpush1.bf16.msra.mxu0 %v1214
    %1250 = vmatprep.subr.bf16.mxu0 0
    %1251 = vmatpush1.bf16.msra.mxu0 %v1215
    %1252 = vmatprep.subr.bf16.mxu0 0
    %1253 = vmatpush1.bf16.msra.mxu0 %v1216
    %1254 = vmatprep.subr.bf16.mxu0 0
    %1255 = vmatpush1.bf16.msra.mxu0 %v1217
    %1256 = vmatprep.subr.bf16.mxu0 0
    %1257 = vmatpush1.bf16.msra.mxu0 %v1218
    %1258 = vmatprep.subr.bf16.mxu0 0
    %1259 = vmatpush1.bf16.msra.mxu0 %v1219
    %1260 = vmatprep.subr.bf16.mxu0 0
    %1261 = vmatpush1.bf16.msra.mxu0 %v1220
    %1262 = vmatprep.subr.bf16.mxu0 0
    %1263 = vmatpush1.bf16.msra.mxu0 %v1221
    %1264 = vmatprep.subr.bf16.mxu0 0
    %1265 = vmatpush1.bf16.msra.mxu0 %v1222
    %1266 = vmatprep.subr.bf16.mxu0 0
    %1267 = vmatpush1.bf16.msra.mxu0 %v1223
    %1268 = vmatprep.subr.bf16.mxu0 0
    %1269 = vmatpush1.bf16.msra.mxu0 %v1224
    %1270 = vmatprep.subr.bf16.mxu0 0
    %1271 = vmatpush1.bf16.msra.mxu0 %v1225
    %1272 = vmatprep.subr.bf16.mxu0 0
    %1273 = vmatpush1.bf16.msra.mxu0 %v1226
    %1274 = vmatprep.subr.bf16.mxu0 0
    %1275 = vmatpush1.bf16.msra.mxu0 %v1227
    %1276 = vmatprep.mubr.bf16.mxu0 %v1108
    %1277 = vmatmul.mubr.bf16.gmra.mrb[0].mxu0 %v1107
    %v1278 = vpop.f32.mrb[0].mxu0
    %v1279 = vadd.f32 %v1146, %v1278
    %v1280 = vpop.f32.mrb[0].mxu0
    %v1281 = vpop.f32.mrb[0].mxu0
    %v1282 = vadd.f32 %v1146, %v1281
    %v1283 = vpop.f32.mrb[0].mxu0
    %1284 = vdwg.mxu0
    %v1285 = vadd.f32 %v934, %v1279
    %v1286 = vadd.f32 %v935, %v1282
    %1287 = vst.msk [vmem:[#allocation23] sm:$0xff] %vm225, %v1285
    %1288 = vst.msk [vmem:[#allocation23 + $0x8] sm:$0xff] %vm225, %v1286
    // Predicated region
    $region126: #{_lambda_.1} parent=1 // pred_check
      _
    $region127: #{_lambda_.1} parent=1 // pred_check_branch
      %1290 = sbr.rel (0) target = $region129
    $region128: #{_lambda_.1} parent=1 // pred_region
      %s1292 = ssub.s32 256, 256
      %1293 = vsyncadd [#allocation4], %s1292
      %s1294 = sshll.u32 [#allocation23], 4
      %s1295 = int_to_ptr.vmem [resolvable:$true] %s1294
      %1300 = dma.vmem_to_hbm [thread:$0]  %s1295, 256, %s18, [#allocation4], 128, 128, 8
    $region129: #{_lambda_.1} parent=1 // pred_fallthru
      _
    // Predicated region
    $region130: #{_lambda_.1} parent=1 // pred_check
      _
    $region131: #{_lambda_.1} parent=1 // pred_check_branch
      %1302 = sbr.rel (0) target = $region133
    $region132: #{_lambda_.1} parent=1 // pred_region
      %1303 = dma.done [#allocation4], 256
    $region133: #{_lambda_.1} parent=1 // pred_fallthru
      _
    %1304 = vsyncpa [#allocation3], 1
    %1305 = vsyncpa [#allocation6], 1
    %1306 = vsyncpa [#allocation9], 1
    %1307 = vsyncpa [#allocation12], 1
    %1308 = vsyncpa [#allocation15], 1
    %1309 = vsyncpa [#allocation18], 1
    %1310 = vsyncpa [#allocation21], 1
    %1311 = vsyncpa [#allocation4], 1

</llo_original>
